<compile_context>
chip_gen: v7x
topology: tpu7x:2x2x1
jax: 0.10.0
libtpu: 0.0.40
codegen_flags: <defaults>
</compile_context>

<pallas_src>
import numpy as np

import jax
import jax.numpy as jnp
from jax.experimental import pallas as pl
from jax.experimental.pallas import tpu as pltpu

LANES = 128
BLOCK_ROWS = 2048                 # (2048, 128) f32 tile = 1 MiB per operand
CHUNK = BLOCK_ROWS * LANES        # elements per grid step
NUM_SLICES = 2                    # leading "parallel" grid axis (v7x megacore)


def _fused_weighted_l1_kernel(scale_ref, x_ref, y_ref, acc_ref):
    """Per step: acc(8,128) += scale[block] * fold(|x - y|)."""
    i = pl.program_id(0)          # parallel slice (TensorCore on v7x)
    j = pl.program_id(1)          # reduction axis within the slice
    nb = pl.num_programs(1)

    @pl.when(j == 0)
    def _init():
        acc_ref[...] = jnp.zeros((8, LANES), jnp.float32)

    # |x - y| computed in the input dtype on the VPU, accumulated in f32.
    d = jnp.abs(x_ref[...] - y_ref[...]).astype(jnp.float32)
    # Fold (BLOCK_ROWS, 128) -> (8, 128): pure vreg+vreg adds (VPU), no XLU.
    partial = jnp.sum(d.reshape(-1, 8, LANES), axis=0)

    b = i * nb + j                # global block id -> per-block scale in SMEM
    acc_ref[...] += scale_ref[b] * partial


def _fused_weighted_l1(scale, x2d, y2d, nb_per_slice):
    """scale: (total_blocks,) f32; x2d/y2d: (total_blocks*BLOCK_ROWS, 128)."""
    out = pl.pallas_call(
        _fused_weighted_l1_kernel,
        out_shape=jax.ShapeDtypeStruct((NUM_SLICES * 8, LANES), jnp.float32),
        grid_spec=pltpu.PrefetchScalarGridSpec(
            num_scalar_prefetch=1,
            grid=(NUM_SLICES, nb_per_slice),
            in_specs=[
                pl.BlockSpec((BLOCK_ROWS, LANES),
                             lambda i, j, s: (i * nb_per_slice + j, 0)),
                pl.BlockSpec((BLOCK_ROWS, LANES),
                             lambda i, j, s: (i * nb_per_slice + j, 0)),
            ],
            # Each parallel slice owns its own resident (8,128) accumulator row.
            out_specs=pl.BlockSpec((8, LANES), lambda i, j, s: (i, 0)),
        ),
        compiler_params=pltpu.CompilerParams(
            dimension_semantics=("parallel", "arbitrary"),
        ),
    )(scale, x2d, y2d)
    # Final (cheap) cross-lane/sublane reduce + cross-core sum in plain XLA.
    return jnp.sum(out)


def pcp_loss(x_feats, y_feats, weights=(1.0, 1.0, 1.0, 1.0, 1.0)):
    """Pallas-backed PCPLoss.forward.

    x_feats, y_feats: lists of feature tensors (e.g. NCHW).  y_feats are
    treated as constants (.detach() -> stop_gradient; forward value identical).
    """
    xs, ys, scales = [], [], []
    total_blocks = 0
    dtype = x_feats[0].dtype

    for xf, yf, w in zip(x_feats, y_feats, weights):
        yf = jax.lax.stop_gradient(yf)
        n = xf.size
        xf = jnp.ravel(xf).astype(dtype)        # free reshape (contiguous)
        yf = jnp.ravel(yf).astype(dtype)
        nb = -(-n // CHUNK)                     # cdiv: blocks for this level
        pad = nb * CHUNK - n
        xs.append(xf)
        ys.append(yf)
        if pad:
            z = jnp.zeros((pad,), dtype)
            xs.append(z)
            ys.append(z)
        # weight_i / numel_i folded into a single per-block scale.
        scales.append(np.full((nb,), float(w) / float(n), dtype=np.float32))
        total_blocks += nb

    # Pad total block count to a multiple of NUM_SLICES (zero data, zero scale).
    extra = (-total_blocks) % NUM_SLICES
    if extra:
        z = jnp.zeros((extra * CHUNK,), dtype)
        xs.append(z)
        ys.append(z)
        scales.append(np.zeros((extra,), dtype=np.float32))
        total_blocks += extra

    x2d = jnp.concatenate(xs).reshape(-1, LANES)
    y2d = jnp.concatenate(ys).reshape(-1, LANES)
    scale = jnp.asarray(np.concatenate(scales))
    nb_per_slice = total_blocks // NUM_SLICES

    return _fused_weighted_l1(scale, x2d, y2d, nb_per_slice)


if __name__ == "__main__":
    key = jax.random.PRNGKey(0)

    # Small VGG-like feature pyramid: 5 levels, NCHW.
    feat_shapes = [
        (2, 4, 16, 16),
        (2, 8, 8, 8),
        (2, 16, 4, 4),
        (2, 32, 2, 2),
        (2, 32, 1, 1),
    ]

    x_feats, y_feats = [], []
    for shp in feat_shapes:
        key, kx, ky = jax.random.split(key, 3)
        x_feats.append(jax.random.normal(kx, shp, dtype=jnp.float32))
        y_feats.append(jax.random.normal(ky, shp, dtype=jnp.float32))

    loss = pcp_loss(x_feats, y_feats)
    loss = jax.block_until_ready(loss)

    # Reference check in plain JAX (same semantics as torch.nn.L1Loss mean).
    ref = sum(jnp.mean(jnp.abs(xf - yf)) for xf, yf in zip(x_feats, y_feats))
    assert jnp.allclose(loss, ref, rtol=1e-5, atol=1e-5), (loss, ref)

    print("KERNEL_OK")
</pallas_src>

<mosaic_0001>
module attributes {stable_mosaic.version = 11 : i64} {
  func.func @_fused_weighted_l1_kernel(%arg0: i32, %arg1: i32, %arg2: memref<6xf32, #tpu.memory_space<smem>>, %arg3: memref<2048x128xf32, #tpu.memory_space<vmem>>, %arg4: memref<2048x128xf32, #tpu.memory_space<vmem>>, %arg5: memref<8x128xf32, #tpu.memory_space<vmem>>) attributes {dimension_semantics = [#tpu.dimension_semantics<parallel>, #tpu.dimension_semantics<arbitrary>], iteration_bounds = array<i64: 2, 3>, scalar_prefetch = 1 : i64, scratch_operands = 0 : i64, tpu.core_type = #tpu.core_type<tc>, window_params = [{transform_indices = @transform_0, window_bounds = array<i64: 2048, 128>}, {transform_indices = @transform_1, window_bounds = array<i64: 2048, 128>}, {transform_indices = @transform_2, window_bounds = array<i64: 8, 128>}]} {
    %c0_i32 = arith.constant 0 : i32
    %0 = arith.cmpi eq, %arg1, %c0_i32 : i32
    %1 = arith.extui %0 : i1 to i32
    %c0_i32_0 = arith.constant 0 : i32
    %2 = arith.cmpi ne, %1, %c0_i32_0 : i32
    scf.if %2 {
      %cst_8 = arith.constant 0.000000e+00 : f32
      %18 = vector.broadcast %cst_8 : f32 to vector<8x128xf32>
      %c0_9 = arith.constant 0 : index
      %c0_10 = arith.constant 0 : index
      %19 = vector.load %arg5[%c0_9, %c0_10] : memref<8x128xf32, #tpu.memory_space<vmem>>, vector<8x128xf32>
      tpu.vector_store %arg5[%c0_9, %c0_10], %18 {strides = array<i32>} : memref<8x128xf32, #tpu.memory_space<vmem>>, vector<8x128xf32>,
    } else {
    }
    %c0 = arith.constant 0 : index
    %c0_1 = arith.constant 0 : index
    %3 = vector.load %arg3[%c0, %c0_1] : memref<2048x128xf32, #tpu.memory_space<vmem>>, vector<2048x128xf32>
    %c0_2 = arith.constant 0 : index
    %c0_3 = arith.constant 0 : index
    %4 = vector.load %arg4[%c0_2, %c0_3] : memref<2048x128xf32, #tpu.memory_space<vmem>>, vector<2048x128xf32>
    %5 = arith.subf %3, %4 : vector<2048x128xf32>
    %6 = math.absf %5 : vector<2048x128xf32>
    %7 = vector.shape_cast %6 : vector<2048x128xf32> to vector<256x8x128xf32>
    %cst = arith.constant dense<0.000000e+00> : vector<8x128xf32>
    %8 = vector.multi_reduction <add>, %7, %cst [0] : vector<256x8x128xf32> to vector<8x128xf32>
    %c3_i32 = arith.constant 3 : i32
    %9 = arith.muli %arg0, %c3_i32 : i32
    %10 = arith.addi %9, %arg1 : i32
    %c0_4 = arith.constant 0 : index
    %c0_5 = arith.constant 0 : index
    %11 = vector.load %arg5[%c0_4, %c0_5] : memref<8x128xf32, #tpu.memory_space<vmem>>, vector<8x128xf32>
    %12 = arith.index_cast %10 : i32 to index
    %13 = memref.load %arg2[%12] : memref<6xf32, #tpu.memory_space<smem>>
    %14 = vector.broadcast %13 : f32 to vector<8x128xf32>
    %15 = arith.mulf %14, %8 : vector<8x128xf32>
    %16 = arith.addf %11, %15 : vector<8x128xf32>
    %c0_6 = arith.constant 0 : index
    %c0_7 = arith.constant 0 : index
    %17 = vector.load %arg5[%c0_6, %c0_7] : memref<8x128xf32, #tpu.memory_space<vmem>>, vector<8x128xf32>
    tpu.vector_store %arg5[%c0_6, %c0_7], %16 {strides = array<i32>} : memref<8x128xf32, #tpu.memory_space<vmem>>, vector<8x128xf32>,
    return
  }
  func.func @transform_0(%arg0: i32, %arg1: i32, %arg2: memref<6xf32, #tpu.memory_space<smem>>) -> (i32, i32) {
    %c3_i32 = arith.constant 3 : i32
    %0 = arith.muli %arg0, %c3_i32 : i32
    %1 = arith.addi %0, %arg1 : i32
    %c0_i32 = arith.constant 0 : i32
    %c0_i32_0 = arith.constant 0 : i32
    return %1, %c0_i32 : i32, i32
  }
  func.func @transform_1(%arg0: i32, %arg1: i32, %arg2: memref<6xf32, #tpu.memory_space<smem>>) -> (i32, i32) {
    %c3_i32 = arith.constant 3 : i32
    %0 = arith.muli %arg0, %c3_i32 : i32
    %1 = arith.addi %0, %arg1 : i32
    %c0_i32 = arith.constant 0 : i32
    %c0_i32_0 = arith.constant 0 : i32
    return %1, %c0_i32 : i32, i32
  }
  func.func @transform_2(%arg0: i32, %arg1: i32, %arg2: memref<6xf32, #tpu.memory_space<smem>>) -> (i32, i32) {
    %c0_i32 = arith.constant 0 : i32
    %c0_i32_0 = arith.constant 0 : i32
    return %arg0, %c0_i32 : i32, i32
  }
}

</mosaic_0001>

<llo_original>
// kernel: tpu_custom_call.1
$region0: #{tpu_custom_call.1}
  #allocation0 [shape = 'u32[]', space=smem, size = 0x4, offset = 0x4, fixed_abs, tag = 'smem constant byte address 0x4 - core index']
  #allocation1 [shape = 'u32[144,128]{1,0:T(1,128)}', space=vmem, size = 0x12000, scoped, tag = 'internal scratch']
  #allocation2 [shape = 's32[1]{0}', space=sflag, size = 0x4, scoped, tag = 'scoped memory for tpu_custom_call.1']
  #allocation3 [shape = 'u8[512]{0}', space=smem, size = 0x200, scoped, tag = 'prefetched SMEM operand 0']
  %s0 = inlined_call_operand.hbm [shape: f32[6], index: 0, kind: input, shape index: {}]
  %s1 = inlined_call_operand.hbm [shape: f32[12288,128], index: 1, kind: input, shape index: {}]
  %s2 = inlined_call_operand.hbm [shape: f32[12288,128], index: 2, kind: input, shape index: {}]
  %s3 = inlined_call_operand.hbm [shape: f32[16,128], index: 3, kind: output, shape index: {}]
  %s4 = sld [smem:[#allocation0]]
  $region53: #{tpu_custom_call.1} parent=0
    _
  %s6 = ssub.s32 1, %s4
  %s7 = scalar_select 0, %s6, %s4
  %9 = dma.hbm_to_smem %s0, 16, [#allocation3], [#allocation2]
  %10 = dma.done [#allocation2], 16
  %11 = sfence
  $region1: #{tpu_custom_call.1} parent=0
    #allocation4 [shape = 'u8[2097152]{0}', space=vmem, size = 0x200000, scoped, tag = 'input window, operand 1']
    #allocation5 [shape = 's32[2]{0}', space=sflag, size = 0x8, scoped, tag = 'scoped memory for tpu_custom_call.1']
    #allocation6 [shape = 's32[2]{0}', space=sflag, size = 0x8, scoped, tag = 'scoped memory for tpu_custom_call.1']
    #allocation7 [shape = 'u8[2097152]{0}', space=vmem, size = 0x200000, scoped, tag = 'input window, operand 2']
    #allocation8 [shape = 's32[2]{0}', space=sflag, size = 0x8, scoped, tag = 'scoped memory for tpu_custom_call.1']
    #allocation9 [shape = 'u8[8192]{0}', space=vmem, size = 0x2000, scoped, tag = 'output window, operand 0']
    %12 = vsyncpa [#allocation5], 0
    %s13 = scalar_lea.sflag [#allocation5], 1
    %14 = vsyncpa %s13, 0
    %15 = vsyncpa [#allocation8], 0
    %s16 = scalar_lea.sflag [#allocation8], 1
    %17 = vsyncpa %s16, 0
    %18 = vsyncpa [#allocation6], 0
    %s19 = scalar_lea.sflag [#allocation6], 1
    %20 = vsyncpa %s19, 0
    loop: start=0, step=1, limit=8
    $region2: #{tpu_custom_call.1} parent=1 // loop_pre_header
      _
    $region3: #{tpu_custom_call.1} parent=1 // loop_header
      %s22 = sphi 0, %s26
      %p23 = scmp.ge.s32.totalorder %s22, 8
      %s29 = sphi 0, %s41
      %s30 = sphi 0, %s37
      %s31 = sphi 0, %s29
      %s32 = sphi 0, %s30
      %s33 = sphi 0, %s31
      %s34 = sphi 0, %s32
      %s48 = sphi 0, %s50
      %s51 = sphi 0, %s48
      %s52 = sphi 0, %s51
      %s68 = sphi 0, %s52
      %s78 = sphi 0, %s80
      %s81 = sphi 0, %s78
      %s82 = sphi 0, %s81
      %s98 = sphi 0, %s82
      %s104 = sphi 0, %s106
      %s107 = sphi 0, %s104
      %s108 = sphi 0, %s107
      %s124 = sphi 0, %s108
    $region4: #{tpu_custom_call.1} parent=1 // loop_header_branch
      %25 = sbr.rel (%p23) target = $region8
    $region5: #{tpu_custom_call.1} parent=1 // loop_body
      %s27 = ssub.s32 %s22, 1
      %s28 = ssub.s32 %s22, 2
      %s35 = sadd.s32 1, %s30
      %p36 = scmp.ge.s32.totalorder %s35, 3
      %s37 = scalar_select %p36, 0, %s35
      %s38 = sadd.s32 1, %s29
      %s39 = scalar_select %p36, %s38, %s29
      %p40 = scmp.ge.s32.totalorder %s39, 2
      %s41 = scalar_select %p40, 0, %s39
      %s42 = smul.u32 %s29, 3
      %s43 = sadd.s32 %s42, %s30
      %s44 = smul.u32 %s41, 3
      %s45 = sadd.s32 %s44, %s37
      %s46 = ssub.s32 %s43, %s45
      %p47 = scmp.eq.s32.totalorder %s46, 0
      %s49 = sadd.s32 %s48, 1
      %s50 = scalar_select %p47, %s48, %s49
      %p53 = pneg %p47
      %p54 = scmp.eq.s32.totalorder %s22, 5
      %p55 = por %p53, %p54
      %p56 = scmp.ne.s32.totalorder %s48, %s51
      %p57 = scmp.eq.s32.totalorder %s22, 0
      %p58 = por %p56, %p57
      %p59 = scmp.ne.s32.totalorder %s48, %s51
      %p60 = scmp.eq.s32.totalorder %s27, 5
      %p61 = por %p59, %p60
      %p62 = scmp.ne.s32.totalorder %s51, %s52
      %p63 = scmp.eq.s32.totalorder %s27, 0
      %p64 = por %p62, %p63
      %p65 = scmp.ne.s32.totalorder %s51, %s52
      %p66 = scmp.eq.s32.totalorder %s28, 5
      %p67 = por %p65, %p66
      %p69 = scmp.ne.s32.totalorder %s52, %s68
      %p70 = scmp.eq.s32.totalorder %s28, 0
      %p71 = por %p69, %p70
      %s72 = smul.u32 %s29, 3
      %s73 = sadd.s32 %s72, %s30
      %s74 = smul.u32 %s41, 3
      %s75 = sadd.s32 %s74, %s37
      %s76 = ssub.s32 %s73, %s75
      %p77 = scmp.eq.s32.totalorder %s76, 0
      %s79 = sadd.s32 %s78, 1
      %s80 = scalar_select %p77, %s78, %s79
      %p83 = pneg %p77
      %p84 = scmp.eq.s32.totalorder %s22, 5
      %p85 = por %p83, %p84
      %p86 = scmp.ne.s32.totalorder %s78, %s81
      %p87 = scmp.eq.s32.totalorder %s22, 0
      %p88 = por %p86, %p87
      %p89 = scmp.ne.s32.totalorder %s78, %s81
      %p90 = scmp.eq.s32.totalorder %s27, 5
      %p91 = por %p89, %p90
      %p92 = scmp.ne.s32.totalorder %s81, %s82
      %p93 = scmp.eq.s32.totalorder %s27, 0
      %p94 = por %p92, %p93
      %p95 = scmp.ne.s32.totalorder %s81, %s82
      %p96 = scmp.eq.s32.totalorder %s28, 5
      %p97 = por %p95, %p96
      %p99 = scmp.ne.s32.totalorder %s82, %s98
      %p100 = scmp.eq.s32.totalorder %s28, 0
      %p101 = por %p99, %p100
      %s102 = ssub.s32 %s29, %s41
      %p103 = scmp.eq.s32.totalorder %s102, 0
      %s105 = sadd.s32 %s104, 1
      %s106 = scalar_select %p103, %s104, %s105
      %p109 = pneg %p103
      %p110 = scmp.eq.s32.totalorder %s22, 5
      %p111 = por %p109, %p110
      %p112 = scmp.ne.s32.totalorder %s104, %s107
      %p113 = scmp.eq.s32.totalorder %s22, 0
      %p114 = por %p112, %p113
      %p115 = scmp.ne.s32.totalorder %s104, %s107
      %p116 = scmp.eq.s32.totalorder %s27, 5
      %p117 = por %p115, %p116
      %p118 = scmp.ne.s32.totalorder %s107, %s108
      %p119 = scmp.eq.s32.totalorder %s27, 0
      %p120 = por %p118, %p119
      %p121 = scmp.ne.s32.totalorder %s107, %s108
      %p122 = scmp.eq.s32.totalorder %s28, 5
      %p123 = por %p121, %p122
      %p125 = scmp.ne.s32.totalorder %s108, %s124
      %p126 = scmp.eq.s32.totalorder %s28, 0
      %p127 = por %p125, %p126
      %p128 = scmp.le.s32.totalorder 1, %s22
      %p129 = scmp.lt.s32.totalorder %s22, 7
      %p130 = pnand %p128, %p129
      %p131 = pneg %p130
      // Predicated region
      $region9: #{tpu_custom_call.1} parent=5 // pred_check
        _
      $region10: #{tpu_custom_call.1} parent=5 // pred_check_branch
        %133 = sbr.rel (%p130) target = $region12
      $region11: #{tpu_custom_call.1} parent=5 // pred_region
        %s134 = ssub.s32 %s22, 1
      $region12: #{tpu_custom_call.1} parent=5 // pred_fallthru
        _
      %p135 = scmp.lt.s32.totalorder %s22, 6
      // Predicated region
      $region13: #{tpu_custom_call.1} parent=5 // pred_check
        %p136 = pneg %p135
      $region14: #{tpu_custom_call.1} parent=5 // pred_check_branch
        %138 = sbr.rel (%p136) target = $region16
      $region15: #{tpu_custom_call.1} parent=5 // pred_region
        // Predicated region
        $region17: #{tpu_custom_call.1} parent=15 // pred_check
          %p139 = pneg %p58
        $region18: #{tpu_custom_call.1} parent=15 // pred_check_branch
          %141 = sbr.rel (%p139) target = $region20
        $region19: #{tpu_custom_call.1} parent=15 // pred_region
          %s142 = sand.u32 %s48, 1
          %s143 = scalar_lea.sflag [#allocation5], %s142
          %s144 = sand.u32 %s48, 1
          %s145 = smul.addr %s144, 2048
          %s146 = scalar_lea.vmem [#allocation4], %s145
          %s147 = smul.u32 %s29, 3
          %s148 = sadd.s32 %s147, %s30
          %s149 = smul.u32 256, %s148
          %s151 = ssub.s32 32768, 32768
          %152 = vsyncadd %s143, %s151
          %s153 = smul.addr %s149, 128
          %s154 = scalar_lea.hbm %s1, %s153
          %s155 = sshll.u32 %s146, 4
          %s156 = int_to_ptr.vmem [resolvable:$true] %s155
          %161 = dma.hbm_to_vmem [thread:$0]  %s154, 32768, %s156, %s143, 128, 128, 8
        $region20: #{tpu_custom_call.1} parent=15 // pred_fallthru
          _
        // Predicated region
        $region21: #{tpu_custom_call.1} parent=15 // pred_check
          %p162 = pneg %p88
        $region22: #{tpu_custom_call.1} parent=15 // pred_check_branch
          %164 = sbr.rel (%p162) target = $region24
        $region23: #{tpu_custom_call.1} parent=15 // pred_region
          %s165 = sand.u32 %s78, 1
          %s166 = scalar_lea.sflag [#allocation8], %s165
          %s167 = sand.u32 %s78, 1
          %s168 = smul.addr %s167, 2048
          %s169 = scalar_lea.vmem [#allocation7], %s168
          %s170 = smul.u32 %s29, 3
          %s171 = sadd.s32 %s170, %s30
          %s172 = smul.u32 256, %s171
          %s174 = ssub.s32 32768, 32768
          %175 = vsyncadd %s166, %s174
          %s176 = smul.addr %s172, 128
          %s177 = scalar_lea.hbm %s2, %s176
          %s178 = sshll.u32 %s169, 4
          %s179 = int_to_ptr.vmem [resolvable:$true] %s178
          %184 = dma.hbm_to_vmem [thread:$0]  %s177, 32768, %s179, %s166, 128, 128, 8
        $region24: #{tpu_custom_call.1} parent=15 // pred_fallthru
          _
      $region16: #{tpu_custom_call.1} parent=5 // pred_fallthru
        _
      %p185 = scmp.le.s32.totalorder 1, %s22
      %p186 = scmp.lt.s32.totalorder %s22, 7
      %p187 = pnand %p185, %p186
      %p188 = pneg %p187
      // Predicated region
      $region25: #{tpu_custom_call.1} parent=5 // pred_check
        _
      $region26: #{tpu_custom_call.1} parent=5 // pred_check_branch
        %190 = sbr.rel (%p187) target = $region28
      $region27: #{tpu_custom_call.1} parent=5 // pred_region
        %s191 = ssub.s32 %s22, 1
        %s192 = sand.u32 %s51, 1
        %s193 = scalar_lea.sflag [#allocation5], %s192
        %s194 = sand.u32 %s51, 1
        %s195 = smul.addr %s194, 2048
        %s196 = scalar_lea.vmem [#allocation4], %s195
        // Predicated region
        $region29: #{tpu_custom_call.1} parent=27 // pred_check
          %p197 = pneg %p64
        $region30: #{tpu_custom_call.1} parent=27 // pred_check_branch
          %199 = sbr.rel (%p197) target = $region32
        $region31: #{tpu_custom_call.1} parent=27 // pred_region
          %200 = dma.done %s193, 32768
        $region32: #{tpu_custom_call.1} parent=27 // pred_fallthru
          _
        %s201 = sand.u32 %s81, 1
        %s202 = scalar_lea.sflag [#allocation8], %s201
        %s203 = sand.u32 %s81, 1
        %s204 = smul.addr %s203, 2048
        %s205 = scalar_lea.vmem [#allocation7], %s204
        // Predicated region
        $region33: #{tpu_custom_call.1} parent=27 // pred_check
          %p206 = pneg %p94
        $region34: #{tpu_custom_call.1} parent=27 // pred_check_branch
          %208 = sbr.rel (%p206) target = $region36
        $region35: #{tpu_custom_call.1} parent=27 // pred_region
          %209 = dma.done %s202, 32768
        $region36: #{tpu_custom_call.1} parent=27 // pred_fallthru
          _
        %s210 = sand.u32 %s51, 1
        %s211 = scalar_lea.sflag [#allocation5], %s210
        %s212 = sand.u32 %s51, 1
        %s213 = smul.addr %s212, 2048
        %s214 = scalar_lea.vmem [#allocation4], %s213
        %p215 = pneg %p64
        %p216 = pneg %p61
        %s217 = sand.u32 %s81, 1
        %s218 = scalar_lea.sflag [#allocation8], %s217
        %s219 = sand.u32 %s81, 1
        %s220 = smul.addr %s219, 2048
        %s221 = scalar_lea.vmem [#allocation7], %s220
        %p222 = pneg %p94
        %p223 = pneg %p91
        %p224 = pneg %p120
        %p225 = pneg %p117
        %s226 = sand.u32 %s107, 1
        %s227 = scalar_lea.sflag [#allocation6], %s226
        %s228 = sand.u32 %s107, 1
        %s229 = smul.addr %s228, 8
        %s230 = scalar_lea.vmem [#allocation9], %s229
        %s231 = smul.u32 %s31, 3
        %s232 = sadd.s32 %s231, %s32
        %s233 = smul.u32 256, %s232
        %s234 = smul.u32 %s31, 3
        %s235 = sadd.s32 %s234, %s32
        %s236 = smul.u32 256, %s235
        %p237 = scmp.eq.s32.totalorder %s32, 0
        // Predicated region
        $region37: #{tpu_custom_call.1} parent=27 // pred_check
          %p238 = pneg %p237
        $region38: #{tpu_custom_call.1} parent=27 // pred_check_branch
          %240 = sbr.rel (%p238) target = $region40
        $region39: #{tpu_custom_call.1} parent=27 // pred_region
          %241 = vst [vmem:[%s230] sm:$0xff] 0.0
        $region40: #{tpu_custom_call.1} parent=27 // pred_fallthru
          _
        %v242 = vld [vmem:[%s196] sm:$0xff]
        %v243 = vld [vmem:[%s196 + $0x8] sm:$0xff]
        %v244 = vld [vmem:[%s196 + $0x10] sm:$0xff]
        %v245 = vld [vmem:[%s196 + $0x18] sm:$0xff]
        %v246 = vld [vmem:[%s196 + $0x20] sm:$0xff]
        %v247 = vld [vmem:[%s196 + $0x28] sm:$0xff]
        %v248 = vld [vmem:[%s196 + $0x30] sm:$0xff]
        %v249 = vld [vmem:[%s196 + $0x38] sm:$0xff]
        %v250 = vld [vmem:[%s196 + $0x40] sm:$0xff]
        %v251 = vld [vmem:[%s196 + $0x48] sm:$0xff]
        %v252 = vld [vmem:[%s196 + $0x50] sm:$0xff]
        %v253 = vld [vmem:[%s196 + $0x58] sm:$0xff]
        %v254 = vld [vmem:[%s196 + $0x60] sm:$0xff]
        %v255 = vld [vmem:[%s196 + $0x68] sm:$0xff]
        %v256 = vld [vmem:[%s196 + $0x70] sm:$0xff]
        %v257 = vld [vmem:[%s196 + $0x78] sm:$0xff]
        %v258 = vld [vmem:[%s196 + $0x80] sm:$0xff]
        %v259 = vld [vmem:[%s196 + $0x88] sm:$0xff]
        %v260 = vld [vmem:[%s196 + $0x90] sm:$0xff]
        %v261 = vld [vmem:[%s196 + $0x98] sm:$0xff]
        %v262 = vld [vmem:[%s196 + $0xa0] sm:$0xff]
        %v263 = vld [vmem:[%s196 + $0xa8] sm:$0xff]
        %v264 = vld [vmem:[%s196 + $0xb0] sm:$0xff]
        %v265 = vld [vmem:[%s196 + $0xb8] sm:$0xff]
        %v266 = vld [vmem:[%s196 + $0xc0] sm:$0xff]
        %v267 = vld [vmem:[%s196 + $0xc8] sm:$0xff]
        %v268 = vld [vmem:[%s196 + $0xd0] sm:$0xff]
        %v269 = vld [vmem:[%s196 + $0xd8] sm:$0xff]
        %v270 = vld [vmem:[%s196 + $0xe0] sm:$0xff]
        %v271 = vld [vmem:[%s196 + $0xe8] sm:$0xff]
        %v272 = vld [vmem:[%s196 + $0xf0] sm:$0xff]
        %v273 = vld [vmem:[%s196 + $0xf8] sm:$0xff]
        %v274 = vld [vmem:[%s196 + $0x100] sm:$0xff]
        %v275 = vld [vmem:[%s196 + $0x108] sm:$0xff]
        %v276 = vld [vmem:[%s196 + $0x110] sm:$0xff]
        %v277 = vld [vmem:[%s196 + $0x118] sm:$0xff]
        %v278 = vld [vmem:[%s196 + $0x120] sm:$0xff]
        %v279 = vld [vmem:[%s196 + $0x128] sm:$0xff]
        %v280 = vld [vmem:[%s196 + $0x130] sm:$0xff]
        %v281 = vld [vmem:[%s196 + $0x138] sm:$0xff]
        %v282 = vld [vmem:[%s196 + $0x140] sm:$0xff]
        %v283 = vld [vmem:[%s196 + $0x148] sm:$0xff]
        %v284 = vld [vmem:[%s196 + $0x150] sm:$0xff]
        %v285 = vld [vmem:[%s196 + $0x158] sm:$0xff]
        %v286 = vld [vmem:[%s196 + $0x160] sm:$0xff]
        %v287 = vld [vmem:[%s196 + $0x168] sm:$0xff]
        %v288 = vld [vmem:[%s196 + $0x170] sm:$0xff]
        %v289 = vld [vmem:[%s196 + $0x178] sm:$0xff]
        %v290 = vld [vmem:[%s196 + $0x180] sm:$0xff]
        %v291 = vld [vmem:[%s196 + $0x188] sm:$0xff]
        %v292 = vld [vmem:[%s196 + $0x190] sm:$0xff]
        %v293 = vld [vmem:[%s196 + $0x198] sm:$0xff]
        %v294 = vld [vmem:[%s196 + $0x1a0] sm:$0xff]
        %v295 = vld [vmem:[%s196 + $0x1a8] sm:$0xff]
        %v296 = vld [vmem:[%s196 + $0x1b0] sm:$0xff]
        %v297 = vld [vmem:[%s196 + $0x1b8] sm:$0xff]
        %v298 = vld [vmem:[%s196 + $0x1c0] sm:$0xff]
        %v299 = vld [vmem:[%s196 + $0x1c8] sm:$0xff]
        %v300 = vld [vmem:[%s196 + $0x1d0] sm:$0xff]
        %v301 = vld [vmem:[%s196 + $0x1d8] sm:$0xff]
        %v302 = vld [vmem:[%s196 + $0x1e0] sm:$0xff]
        %v303 = vld [vmem:[%s196 + $0x1e8] sm:$0xff]
        %v304 = vld [vmem:[%s196 + $0x1f0] sm:$0xff]
        %v305 = vld [vmem:[%s196 + $0x1f8] sm:$0xff]
        %v306 = vld [vmem:[%s196 + $0x200] sm:$0xff]
        %v307 = vld [vmem:[%s196 + $0x208] sm:$0xff]
        %v308 = vld [vmem:[%s196 + $0x210] sm:$0xff]
        %v309 = vld [vmem:[%s196 + $0x218] sm:$0xff]
        %v310 = vld [vmem:[%s196 + $0x220] sm:$0xff]
        %v311 = vld [vmem:[%s196 + $0x228] sm:$0xff]
        %v312 = vld [vmem:[%s196 + $0x230] sm:$0xff]
        %v313 = vld [vmem:[%s196 + $0x238] sm:$0xff]
        %v314 = vld [vmem:[%s196 + $0x240] sm:$0xff]
        %v315 = vld [vmem:[%s196 + $0x248] sm:$0xff]
        %v316 = vld [vmem:[%s196 + $0x250] sm:$0xff]
        %v317 = vld [vmem:[%s196 + $0x258] sm:$0xff]
        %v318 = vld [vmem:[%s196 + $0x260] sm:$0xff]
        %v319 = vld [vmem:[%s196 + $0x268] sm:$0xff]
        %v320 = vld [vmem:[%s196 + $0x270] sm:$0xff]
        %v321 = vld [vmem:[%s196 + $0x278] sm:$0xff]
        %v322 = vld [vmem:[%s196 + $0x280] sm:$0xff]
        %v323 = vld [vmem:[%s196 + $0x288] sm:$0xff]
        %v324 = vld [vmem:[%s196 + $0x290] sm:$0xff]
        %v325 = vld [vmem:[%s196 + $0x298] sm:$0xff]
        %v326 = vld [vmem:[%s196 + $0x2a0] sm:$0xff]
        %v327 = vld [vmem:[%s196 + $0x2a8] sm:$0xff]
        %v328 = vld [vmem:[%s196 + $0x2b0] sm:$0xff]
        %v329 = vld [vmem:[%s196 + $0x2b8] sm:$0xff]
        %v330 = vld [vmem:[%s196 + $0x2c0] sm:$0xff]
        %v331 = vld [vmem:[%s196 + $0x2c8] sm:$0xff]
        %v332 = vld [vmem:[%s196 + $0x2d0] sm:$0xff]
        %v333 = vld [vmem:[%s196 + $0x2d8] sm:$0xff]
        %v334 = vld [vmem:[%s196 + $0x2e0] sm:$0xff]
        %v335 = vld [vmem:[%s196 + $0x2e8] sm:$0xff]
        %v336 = vld [vmem:[%s196 + $0x2f0] sm:$0xff]
        %v337 = vld [vmem:[%s196 + $0x2f8] sm:$0xff]
        %v338 = vld [vmem:[%s196 + $0x300] sm:$0xff]
        %v339 = vld [vmem:[%s196 + $0x308] sm:$0xff]
        %v340 = vld [vmem:[%s196 + $0x310] sm:$0xff]
        %v341 = vld [vmem:[%s196 + $0x318] sm:$0xff]
        %v342 = vld [vmem:[%s196 + $0x320] sm:$0xff]
        %v343 = vld [vmem:[%s196 + $0x328] sm:$0xff]
        %v344 = vld [vmem:[%s196 + $0x330] sm:$0xff]
        %v345 = vld [vmem:[%s196 + $0x338] sm:$0xff]
        %v346 = vld [vmem:[%s196 + $0x340] sm:$0xff]
        %v347 = vld [vmem:[%s196 + $0x348] sm:$0xff]
        %v348 = vld [vmem:[%s196 + $0x350] sm:$0xff]
        %v349 = vld [vmem:[%s196 + $0x358] sm:$0xff]
        %v350 = vld [vmem:[%s196 + $0x360] sm:$0xff]
        %v351 = vld [vmem:[%s196 + $0x368] sm:$0xff]
        %v352 = vld [vmem:[%s196 + $0x370] sm:$0xff]
        %v353 = vld [vmem:[%s196 + $0x378] sm:$0xff]
        %v354 = vld [vmem:[%s196 + $0x380] sm:$0xff]
        %v355 = vld [vmem:[%s196 + $0x388] sm:$0xff]
        %v356 = vld [vmem:[%s196 + $0x390] sm:$0xff]
        %v357 = vld [vmem:[%s196 + $0x398] sm:$0xff]
        %v358 = vld [vmem:[%s196 + $0x3a0] sm:$0xff]
        %v359 = vld [vmem:[%s196 + $0x3a8] sm:$0xff]
        %v360 = vld [vmem:[%s196 + $0x3b0] sm:$0xff]
        %v361 = vld [vmem:[%s196 + $0x3b8] sm:$0xff]
        %v362 = vld [vmem:[%s196 + $0x3c0] sm:$0xff]
        %v363 = vld [vmem:[%s196 + $0x3c8] sm:$0xff]
        %v364 = vld [vmem:[%s196 + $0x3d0] sm:$0xff]
        %v365 = vld [vmem:[%s196 + $0x3d8] sm:$0xff]
        %v366 = vld [vmem:[%s196 + $0x3e0] sm:$0xff]
        %v367 = vld [vmem:[%s196 + $0x3e8] sm:$0xff]
        %v368 = vld [vmem:[%s196 + $0x3f0] sm:$0xff]
        %v369 = vld [vmem:[%s196 + $0x3f8] sm:$0xff]
        %v370 = vld [vmem:[%s196 + $0x400] sm:$0xff]
        %v371 = vld [vmem:[%s196 + $0x408] sm:$0xff]
        %v372 = vld [vmem:[%s196 + $0x410] sm:$0xff]
        %v373 = vld [vmem:[%s196 + $0x418] sm:$0xff]
        %v374 = vld [vmem:[%s196 + $0x420] sm:$0xff]
        %v375 = vld [vmem:[%s196 + $0x428] sm:$0xff]
        %v376 = vld [vmem:[%s196 + $0x430] sm:$0xff]
        %v377 = vld [vmem:[%s196 + $0x438] sm:$0xff]
        %v378 = vld [vmem:[%s196 + $0x440] sm:$0xff]
        %v379 = vld [vmem:[%s196 + $0x448] sm:$0xff]
        %v380 = vld [vmem:[%s196 + $0x450] sm:$0xff]
        %v381 = vld [vmem:[%s196 + $0x458] sm:$0xff]
        %v382 = vld [vmem:[%s196 + $0x460] sm:$0xff]
        %v383 = vld [vmem:[%s196 + $0x468] sm:$0xff]
        %v384 = vld [vmem:[%s196 + $0x470] sm:$0xff]
        %v385 = vld [vmem:[%s196 + $0x478] sm:$0xff]
        %v386 = vld [vmem:[%s196 + $0x480] sm:$0xff]
        %v387 = vld [vmem:[%s196 + $0x488] sm:$0xff]
        %v388 = vld [vmem:[%s196 + $0x490] sm:$0xff]
        %v389 = vld [vmem:[%s196 + $0x498] sm:$0xff]
        %v390 = vld [vmem:[%s196 + $0x4a0] sm:$0xff]
        %v391 = vld [vmem:[%s196 + $0x4a8] sm:$0xff]
        %v392 = vld [vmem:[%s196 + $0x4b0] sm:$0xff]
        %v393 = vld [vmem:[%s196 + $0x4b8] sm:$0xff]
        %v394 = vld [vmem:[%s196 + $0x4c0] sm:$0xff]
        %v395 = vld [vmem:[%s196 + $0x4c8] sm:$0xff]
        %v396 = vld [vmem:[%s196 + $0x4d0] sm:$0xff]
        %v397 = vld [vmem:[%s196 + $0x4d8] sm:$0xff]
        %v398 = vld [vmem:[%s196 + $0x4e0] sm:$0xff]
        %v399 = vld [vmem:[%s196 + $0x4e8] sm:$0xff]
        %v400 = vld [vmem:[%s196 + $0x4f0] sm:$0xff]
        %v401 = vld [vmem:[%s196 + $0x4f8] sm:$0xff]
        %v402 = vld [vmem:[%s196 + $0x500] sm:$0xff]
        %v403 = vld [vmem:[%s196 + $0x508] sm:$0xff]
        %v404 = vld [vmem:[%s196 + $0x510] sm:$0xff]
        %v405 = vld [vmem:[%s196 + $0x518] sm:$0xff]
        %v406 = vld [vmem:[%s196 + $0x520] sm:$0xff]
        %v407 = vld [vmem:[%s196 + $0x528] sm:$0xff]
        %v408 = vld [vmem:[%s196 + $0x530] sm:$0xff]
        %v409 = vld [vmem:[%s196 + $0x538] sm:$0xff]
        %v410 = vld [vmem:[%s196 + $0x540] sm:$0xff]
        %v411 = vld [vmem:[%s196 + $0x548] sm:$0xff]
        %v412 = vld [vmem:[%s196 + $0x550] sm:$0xff]
        %v413 = vld [vmem:[%s196 + $0x558] sm:$0xff]
        %v414 = vld [vmem:[%s196 + $0x560] sm:$0xff]
        %v415 = vld [vmem:[%s196 + $0x568] sm:$0xff]
        %v416 = vld [vmem:[%s196 + $0x570] sm:$0xff]
        %v417 = vld [vmem:[%s196 + $0x578] sm:$0xff]
        %v418 = vld [vmem:[%s196 + $0x580] sm:$0xff]
        %v419 = vld [vmem:[%s196 + $0x588] sm:$0xff]
        %v420 = vld [vmem:[%s196 + $0x590] sm:$0xff]
        %v421 = vld [vmem:[%s196 + $0x598] sm:$0xff]
        %v422 = vld [vmem:[%s196 + $0x5a0] sm:$0xff]
        %v423 = vld [vmem:[%s196 + $0x5a8] sm:$0xff]
        %v424 = vld [vmem:[%s196 + $0x5b0] sm:$0xff]
        %v425 = vld [vmem:[%s196 + $0x5b8] sm:$0xff]
        %v426 = vld [vmem:[%s196 + $0x5c0] sm:$0xff]
        %v427 = vld [vmem:[%s196 + $0x5c8] sm:$0xff]
        %v428 = vld [vmem:[%s196 + $0x5d0] sm:$0xff]
        %v429 = vld [vmem:[%s196 + $0x5d8] sm:$0xff]
        %v430 = vld [vmem:[%s196 + $0x5e0] sm:$0xff]
        %v431 = vld [vmem:[%s196 + $0x5e8] sm:$0xff]
        %v432 = vld [vmem:[%s196 + $0x5f0] sm:$0xff]
        %v433 = vld [vmem:[%s196 + $0x5f8] sm:$0xff]
        %v434 = vld [vmem:[%s196 + $0x600] sm:$0xff]
        %v435 = vld [vmem:[%s196 + $0x608] sm:$0xff]
        %v436 = vld [vmem:[%s196 + $0x610] sm:$0xff]
        %v437 = vld [vmem:[%s196 + $0x618] sm:$0xff]
        %v438 = vld [vmem:[%s196 + $0x620] sm:$0xff]
        %v439 = vld [vmem:[%s196 + $0x628] sm:$0xff]
        %v440 = vld [vmem:[%s196 + $0x630] sm:$0xff]
        %v441 = vld [vmem:[%s196 + $0x638] sm:$0xff]
        %v442 = vld [vmem:[%s196 + $0x640] sm:$0xff]
        %v443 = vld [vmem:[%s196 + $0x648] sm:$0xff]
        %v444 = vld [vmem:[%s196 + $0x650] sm:$0xff]
        %v445 = vld [vmem:[%s196 + $0x658] sm:$0xff]
        %v446 = vld [vmem:[%s196 + $0x660] sm:$0xff]
        %v447 = vld [vmem:[%s196 + $0x668] sm:$0xff]
        %v448 = vld [vmem:[%s196 + $0x670] sm:$0xff]
        %v449 = vld [vmem:[%s196 + $0x678] sm:$0xff]
        %v450 = vld [vmem:[%s196 + $0x680] sm:$0xff]
        %v451 = vld [vmem:[%s196 + $0x688] sm:$0xff]
        %v452 = vld [vmem:[%s196 + $0x690] sm:$0xff]
        %v453 = vld [vmem:[%s196 + $0x698] sm:$0xff]
        %v454 = vld [vmem:[%s196 + $0x6a0] sm:$0xff]
        %v455 = vld [vmem:[%s196 + $0x6a8] sm:$0xff]
        %v456 = vld [vmem:[%s196 + $0x6b0] sm:$0xff]
        %v457 = vld [vmem:[%s196 + $0x6b8] sm:$0xff]
        %v458 = vld [vmem:[%s196 + $0x6c0] sm:$0xff]
        %v459 = vld [vmem:[%s196 + $0x6c8] sm:$0xff]
        %v460 = vld [vmem:[%s196 + $0x6d0] sm:$0xff]
        %v461 = vld [vmem:[%s196 + $0x6d8] sm:$0xff]
        %v462 = vld [vmem:[%s196 + $0x6e0] sm:$0xff]
        %v463 = vld [vmem:[%s196 + $0x6e8] sm:$0xff]
        %v464 = vld [vmem:[%s196 + $0x6f0] sm:$0xff]
        %v465 = vld [vmem:[%s196 + $0x6f8] sm:$0xff]
        %v466 = vld [vmem:[%s196 + $0x700] sm:$0xff]
        %v467 = vld [vmem:[%s196 + $0x708] sm:$0xff]
        %v468 = vld [vmem:[%s196 + $0x710] sm:$0xff]
        %v469 = vld [vmem:[%s196 + $0x718] sm:$0xff]
        %v470 = vld [vmem:[%s196 + $0x720] sm:$0xff]
        %v471 = vld [vmem:[%s196 + $0x728] sm:$0xff]
        %v472 = vld [vmem:[%s196 + $0x730] sm:$0xff]
        %v473 = vld [vmem:[%s196 + $0x738] sm:$0xff]
        %v474 = vld [vmem:[%s196 + $0x740] sm:$0xff]
        %v475 = vld [vmem:[%s196 + $0x748] sm:$0xff]
        %v476 = vld [vmem:[%s196 + $0x750] sm:$0xff]
        %v477 = vld [vmem:[%s196 + $0x758] sm:$0xff]
        %v478 = vld [vmem:[%s196 + $0x760] sm:$0xff]
        %v479 = vld [vmem:[%s196 + $0x768] sm:$0xff]
        %v480 = vld [vmem:[%s196 + $0x770] sm:$0xff]
        %v481 = vld [vmem:[%s196 + $0x778] sm:$0xff]
        %v482 = vld [vmem:[%s196 + $0x780] sm:$0xff]
        %v483 = vld [vmem:[%s196 + $0x788] sm:$0xff]
        %v484 = vld [vmem:[%s196 + $0x790] sm:$0xff]
        %v485 = vld [vmem:[%s196 + $0x798] sm:$0xff]
        %v486 = vld [vmem:[%s196 + $0x7a0] sm:$0xff]
        %v487 = vld [vmem:[%s196 + $0x7a8] sm:$0xff]
        %v488 = vld [vmem:[%s196 + $0x7b0] sm:$0xff]
        %v489 = vld [vmem:[%s196 + $0x7b8] sm:$0xff]
        %v490 = vld [vmem:[%s196 + $0x7c0] sm:$0xff]
        %v491 = vld [vmem:[%s196 + $0x7c8] sm:$0xff]
        %v492 = vld [vmem:[%s196 + $0x7d0] sm:$0xff]
        %v493 = vld [vmem:[%s196 + $0x7d8] sm:$0xff]
        %v494 = vld [vmem:[%s196 + $0x7e0] sm:$0xff]
        %v495 = vld [vmem:[%s196 + $0x7e8] sm:$0xff]
        %v496 = vld [vmem:[%s196 + $0x7f0] sm:$0xff]
        %v497 = vld [vmem:[%s196 + $0x7f8] sm:$0xff]
        %v498 = vld [vmem:[%s205] sm:$0xff]
        %v499 = vld [vmem:[%s205 + $0x8] sm:$0xff]
        %v500 = vld [vmem:[%s205 + $0x10] sm:$0xff]
        %v501 = vld [vmem:[%s205 + $0x18] sm:$0xff]
        %v502 = vld [vmem:[%s205 + $0x20] sm:$0xff]
        %v503 = vld [vmem:[%s205 + $0x28] sm:$0xff]
        %v504 = vld [vmem:[%s205 + $0x30] sm:$0xff]
        %v505 = vld [vmem:[%s205 + $0x38] sm:$0xff]
        %v506 = vld [vmem:[%s205 + $0x40] sm:$0xff]
        %v507 = vld [vmem:[%s205 + $0x48] sm:$0xff]
        %v508 = vld [vmem:[%s205 + $0x50] sm:$0xff]
        %v509 = vld [vmem:[%s205 + $0x58] sm:$0xff]
        %v510 = vld [vmem:[%s205 + $0x60] sm:$0xff]
        %v511 = vld [vmem:[%s205 + $0x68] sm:$0xff]
        %v512 = vld [vmem:[%s205 + $0x70] sm:$0xff]
        %v513 = vld [vmem:[%s205 + $0x78] sm:$0xff]
        %v514 = vld [vmem:[%s205 + $0x80] sm:$0xff]
        %v515 = vld [vmem:[%s205 + $0x88] sm:$0xff]
        %v516 = vld [vmem:[%s205 + $0x90] sm:$0xff]
        %v517 = vld [vmem:[%s205 + $0x98] sm:$0xff]
        %v518 = vld [vmem:[%s205 + $0xa0] sm:$0xff]
        %v519 = vld [vmem:[%s205 + $0xa8] sm:$0xff]
        %v520 = vld [vmem:[%s205 + $0xb0] sm:$0xff]
        %v521 = vld [vmem:[%s205 + $0xb8] sm:$0xff]
        %v522 = vld [vmem:[%s205 + $0xc0] sm:$0xff]
        %v523 = vld [vmem:[%s205 + $0xc8] sm:$0xff]
        %v524 = vld [vmem:[%s205 + $0xd0] sm:$0xff]
        %v525 = vld [vmem:[%s205 + $0xd8] sm:$0xff]
        %v526 = vld [vmem:[%s205 + $0xe0] sm:$0xff]
        %v527 = vld [vmem:[%s205 + $0xe8] sm:$0xff]
        %v528 = vld [vmem:[%s205 + $0xf0] sm:$0xff]
        %v529 = vld [vmem:[%s205 + $0xf8] sm:$0xff]
        %v530 = vld [vmem:[%s205 + $0x100] sm:$0xff]
        %v531 = vld [vmem:[%s205 + $0x108] sm:$0xff]
        %v532 = vld [vmem:[%s205 + $0x110] sm:$0xff]
        %v533 = vld [vmem:[%s205 + $0x118] sm:$0xff]
        %v534 = vld [vmem:[%s205 + $0x120] sm:$0xff]
        %v535 = vld [vmem:[%s205 + $0x128] sm:$0xff]
        %v536 = vld [vmem:[%s205 + $0x130] sm:$0xff]
        %v537 = vld [vmem:[%s205 + $0x138] sm:$0xff]
        %v538 = vld [vmem:[%s205 + $0x140] sm:$0xff]
        %v539 = vld [vmem:[%s205 + $0x148] sm:$0xff]
        %v540 = vld [vmem:[%s205 + $0x150] sm:$0xff]
        %v541 = vld [vmem:[%s205 + $0x158] sm:$0xff]
        %v542 = vld [vmem:[%s205 + $0x160] sm:$0xff]
        %v543 = vld [vmem:[%s205 + $0x168] sm:$0xff]
        %v544 = vld [vmem:[%s205 + $0x170] sm:$0xff]
        %v545 = vld [vmem:[%s205 + $0x178] sm:$0xff]
        %v546 = vld [vmem:[%s205 + $0x180] sm:$0xff]
        %v547 = vld [vmem:[%s205 + $0x188] sm:$0xff]
        %v548 = vld [vmem:[%s205 + $0x190] sm:$0xff]
        %v549 = vld [vmem:[%s205 + $0x198] sm:$0xff]
        %v550 = vld [vmem:[%s205 + $0x1a0] sm:$0xff]
        %v551 = vld [vmem:[%s205 + $0x1a8] sm:$0xff]
        %v552 = vld [vmem:[%s205 + $0x1b0] sm:$0xff]
        %v553 = vld [vmem:[%s205 + $0x1b8] sm:$0xff]
        %v554 = vld [vmem:[%s205 + $0x1c0] sm:$0xff]
        %v555 = vld [vmem:[%s205 + $0x1c8] sm:$0xff]
        %v556 = vld [vmem:[%s205 + $0x1d0] sm:$0xff]
        %v557 = vld [vmem:[%s205 + $0x1d8] sm:$0xff]
        %v558 = vld [vmem:[%s205 + $0x1e0] sm:$0xff]
        %v559 = vld [vmem:[%s205 + $0x1e8] sm:$0xff]
        %v560 = vld [vmem:[%s205 + $0x1f0] sm:$0xff]
        %v561 = vld [vmem:[%s205 + $0x1f8] sm:$0xff]
        %v562 = vld [vmem:[%s205 + $0x200] sm:$0xff]
        %v563 = vld [vmem:[%s205 + $0x208] sm:$0xff]
        %v564 = vld [vmem:[%s205 + $0x210] sm:$0xff]
        %v565 = vld [vmem:[%s205 + $0x218] sm:$0xff]
        %v566 = vld [vmem:[%s205 + $0x220] sm:$0xff]
        %v567 = vld [vmem:[%s205 + $0x228] sm:$0xff]
        %v568 = vld [vmem:[%s205 + $0x230] sm:$0xff]
        %v569 = vld [vmem:[%s205 + $0x238] sm:$0xff]
        %v570 = vld [vmem:[%s205 + $0x240] sm:$0xff]
        %v571 = vld [vmem:[%s205 + $0x248] sm:$0xff]
        %v572 = vld [vmem:[%s205 + $0x250] sm:$0xff]
        %v573 = vld [vmem:[%s205 + $0x258] sm:$0xff]
        %v574 = vld [vmem:[%s205 + $0x260] sm:$0xff]
        %v575 = vld [vmem:[%s205 + $0x268] sm:$0xff]
        %v576 = vld [vmem:[%s205 + $0x270] sm:$0xff]
        %v577 = vld [vmem:[%s205 + $0x278] sm:$0xff]
        %v578 = vld [vmem:[%s205 + $0x280] sm:$0xff]
        %v579 = vld [vmem:[%s205 + $0x288] sm:$0xff]
        %v580 = vld [vmem:[%s205 + $0x290] sm:$0xff]
        %v581 = vld [vmem:[%s205 + $0x298] sm:$0xff]
        %v582 = vld [vmem:[%s205 + $0x2a0] sm:$0xff]
        %v583 = vld [vmem:[%s205 + $0x2a8] sm:$0xff]
        %v584 = vld [vmem:[%s205 + $0x2b0] sm:$0xff]
        %v585 = vld [vmem:[%s205 + $0x2b8] sm:$0xff]
        %v586 = vld [vmem:[%s205 + $0x2c0] sm:$0xff]
        %v587 = vld [vmem:[%s205 + $0x2c8] sm:$0xff]
        %v588 = vld [vmem:[%s205 + $0x2d0] sm:$0xff]
        %v589 = vld [vmem:[%s205 + $0x2d8] sm:$0xff]
        %v590 = vld [vmem:[%s205 + $0x2e0] sm:$0xff]
        %v591 = vld [vmem:[%s205 + $0x2e8] sm:$0xff]
        %v592 = vld [vmem:[%s205 + $0x2f0] sm:$0xff]
        %v593 = vld [vmem:[%s205 + $0x2f8] sm:$0xff]
        %v594 = vld [vmem:[%s205 + $0x300] sm:$0xff]
        %v595 = vld [vmem:[%s205 + $0x308] sm:$0xff]
        %v596 = vld [vmem:[%s205 + $0x310] sm:$0xff]
        %v597 = vld [vmem:[%s205 + $0x318] sm:$0xff]
        %v598 = vld [vmem:[%s205 + $0x320] sm:$0xff]
        %v599 = vld [vmem:[%s205 + $0x328] sm:$0xff]
        %v600 = vld [vmem:[%s205 + $0x330] sm:$0xff]
        %v601 = vld [vmem:[%s205 + $0x338] sm:$0xff]
        %v602 = vld [vmem:[%s205 + $0x340] sm:$0xff]
        %v603 = vld [vmem:[%s205 + $0x348] sm:$0xff]
        %v604 = vld [vmem:[%s205 + $0x350] sm:$0xff]
        %v605 = vld [vmem:[%s205 + $0x358] sm:$0xff]
        %v606 = vld [vmem:[%s205 + $0x360] sm:$0xff]
        %v607 = vld [vmem:[%s205 + $0x368] sm:$0xff]
        %v608 = vld [vmem:[%s205 + $0x370] sm:$0xff]
        %v609 = vld [vmem:[%s205 + $0x378] sm:$0xff]
        %v610 = vld [vmem:[%s205 + $0x380] sm:$0xff]
        %v611 = vld [vmem:[%s205 + $0x388] sm:$0xff]
        %v612 = vld [vmem:[%s205 + $0x390] sm:$0xff]
        %v613 = vld [vmem:[%s205 + $0x398] sm:$0xff]
        %v614 = vld [vmem:[%s205 + $0x3a0] sm:$0xff]
        %v615 = vld [vmem:[%s205 + $0x3a8] sm:$0xff]
        %v616 = vld [vmem:[%s205 + $0x3b0] sm:$0xff]
        %v617 = vld [vmem:[%s205 + $0x3b8] sm:$0xff]
        %v618 = vld [vmem:[%s205 + $0x3c0] sm:$0xff]
        %v619 = vld [vmem:[%s205 + $0x3c8] sm:$0xff]
        %v620 = vld [vmem:[%s205 + $0x3d0] sm:$0xff]
        %v621 = vld [vmem:[%s205 + $0x3d8] sm:$0xff]
        %v622 = vld [vmem:[%s205 + $0x3e0] sm:$0xff]
        %v623 = vld [vmem:[%s205 + $0x3e8] sm:$0xff]
        %v624 = vld [vmem:[%s205 + $0x3f0] sm:$0xff]
        %v625 = vld [vmem:[%s205 + $0x3f8] sm:$0xff]
        %v626 = vld [vmem:[%s205 + $0x400] sm:$0xff]
        %v627 = vld [vmem:[%s205 + $0x408] sm:$0xff]
        %v628 = vld [vmem:[%s205 + $0x410] sm:$0xff]
        %v629 = vld [vmem:[%s205 + $0x418] sm:$0xff]
        %v630 = vld [vmem:[%s205 + $0x420] sm:$0xff]
        %v631 = vld [vmem:[%s205 + $0x428] sm:$0xff]
        %v632 = vld [vmem:[%s205 + $0x430] sm:$0xff]
        %v633 = vld [vmem:[%s205 + $0x438] sm:$0xff]
        %v634 = vld [vmem:[%s205 + $0x440] sm:$0xff]
        %v635 = vld [vmem:[%s205 + $0x448] sm:$0xff]
        %v636 = vld [vmem:[%s205 + $0x450] sm:$0xff]
        %v637 = vld [vmem:[%s205 + $0x458] sm:$0xff]
        %v638 = vld [vmem:[%s205 + $0x460] sm:$0xff]
        %v639 = vld [vmem:[%s205 + $0x468] sm:$0xff]
        %v640 = vld [vmem:[%s205 + $0x470] sm:$0xff]
        %v641 = vld [vmem:[%s205 + $0x478] sm:$0xff]
        %v642 = vld [vmem:[%s205 + $0x480] sm:$0xff]
        %v643 = vld [vmem:[%s205 + $0x488] sm:$0xff]
        %v644 = vld [vmem:[%s205 + $0x490] sm:$0xff]
        %v645 = vld [vmem:[%s205 + $0x498] sm:$0xff]
        %v646 = vld [vmem:[%s205 + $0x4a0] sm:$0xff]
        %v647 = vld [vmem:[%s205 + $0x4a8] sm:$0xff]
        %v648 = vld [vmem:[%s205 + $0x4b0] sm:$0xff]
        %v649 = vld [vmem:[%s205 + $0x4b8] sm:$0xff]
        %v650 = vld [vmem:[%s205 + $0x4c0] sm:$0xff]
        %v651 = vld [vmem:[%s205 + $0x4c8] sm:$0xff]
        %v652 = vld [vmem:[%s205 + $0x4d0] sm:$0xff]
        %v653 = vld [vmem:[%s205 + $0x4d8] sm:$0xff]
        %v654 = vld [vmem:[%s205 + $0x4e0] sm:$0xff]
        %v655 = vld [vmem:[%s205 + $0x4e8] sm:$0xff]
        %v656 = vld [vmem:[%s205 + $0x4f0] sm:$0xff]
        %v657 = vld [vmem:[%s205 + $0x4f8] sm:$0xff]
        %v658 = vld [vmem:[%s205 + $0x500] sm:$0xff]
        %v659 = vld [vmem:[%s205 + $0x508] sm:$0xff]
        %v660 = vld [vmem:[%s205 + $0x510] sm:$0xff]
        %v661 = vld [vmem:[%s205 + $0x518] sm:$0xff]
        %v662 = vld [vmem:[%s205 + $0x520] sm:$0xff]
        %v663 = vld [vmem:[%s205 + $0x528] sm:$0xff]
        %v664 = vld [vmem:[%s205 + $0x530] sm:$0xff]
        %v665 = vld [vmem:[%s205 + $0x538] sm:$0xff]
        %v666 = vld [vmem:[%s205 + $0x540] sm:$0xff]
        %v667 = vld [vmem:[%s205 + $0x548] sm:$0xff]
        %v668 = vld [vmem:[%s205 + $0x550] sm:$0xff]
        %v669 = vld [vmem:[%s205 + $0x558] sm:$0xff]
        %v670 = vld [vmem:[%s205 + $0x560] sm:$0xff]
        %v671 = vld [vmem:[%s205 + $0x568] sm:$0xff]
        %v672 = vld [vmem:[%s205 + $0x570] sm:$0xff]
        %v673 = vld [vmem:[%s205 + $0x578] sm:$0xff]
        %v674 = vld [vmem:[%s205 + $0x580] sm:$0xff]
        %v675 = vld [vmem:[%s205 + $0x588] sm:$0xff]
        %v676 = vld [vmem:[%s205 + $0x590] sm:$0xff]
        %v677 = vld [vmem:[%s205 + $0x598] sm:$0xff]
        %v678 = vld [vmem:[%s205 + $0x5a0] sm:$0xff]
        %v679 = vld [vmem:[%s205 + $0x5a8] sm:$0xff]
        %v680 = vld [vmem:[%s205 + $0x5b0] sm:$0xff]
        %v681 = vld [vmem:[%s205 + $0x5b8] sm:$0xff]
        %v682 = vld [vmem:[%s205 + $0x5c0] sm:$0xff]
        %v683 = vld [vmem:[%s205 + $0x5c8] sm:$0xff]
        %v684 = vld [vmem:[%s205 + $0x5d0] sm:$0xff]
        %v685 = vld [vmem:[%s205 + $0x5d8] sm:$0xff]
        %v686 = vld [vmem:[%s205 + $0x5e0] sm:$0xff]
        %v687 = vld [vmem:[%s205 + $0x5e8] sm:$0xff]
        %v688 = vld [vmem:[%s205 + $0x5f0] sm:$0xff]
        %v689 = vld [vmem:[%s205 + $0x5f8] sm:$0xff]
        %v690 = vld [vmem:[%s205 + $0x600] sm:$0xff]
        %v691 = vld [vmem:[%s205 + $0x608] sm:$0xff]
        %v692 = vld [vmem:[%s205 + $0x610] sm:$0xff]
        %v693 = vld [vmem:[%s205 + $0x618] sm:$0xff]
        %v694 = vld [vmem:[%s205 + $0x620] sm:$0xff]
        %v695 = vld [vmem:[%s205 + $0x628] sm:$0xff]
        %v696 = vld [vmem:[%s205 + $0x630] sm:$0xff]
        %v697 = vld [vmem:[%s205 + $0x638] sm:$0xff]
        %v698 = vld [vmem:[%s205 + $0x640] sm:$0xff]
        %v699 = vld [vmem:[%s205 + $0x648] sm:$0xff]
        %v700 = vld [vmem:[%s205 + $0x650] sm:$0xff]
        %v701 = vld [vmem:[%s205 + $0x658] sm:$0xff]
        %v702 = vld [vmem:[%s205 + $0x660] sm:$0xff]
        %v703 = vld [vmem:[%s205 + $0x668] sm:$0xff]
        %v704 = vld [vmem:[%s205 + $0x670] sm:$0xff]
        %v705 = vld [vmem:[%s205 + $0x678] sm:$0xff]
        %v706 = vld [vmem:[%s205 + $0x680] sm:$0xff]
        %v707 = vld [vmem:[%s205 + $0x688] sm:$0xff]
        %v708 = vld [vmem:[%s205 + $0x690] sm:$0xff]
        %v709 = vld [vmem:[%s205 + $0x698] sm:$0xff]
        %v710 = vld [vmem:[%s205 + $0x6a0] sm:$0xff]
        %v711 = vld [vmem:[%s205 + $0x6a8] sm:$0xff]
        %v712 = vld [vmem:[%s205 + $0x6b0] sm:$0xff]
        %v713 = vld [vmem:[%s205 + $0x6b8] sm:$0xff]
        %v714 = vld [vmem:[%s205 + $0x6c0] sm:$0xff]
        %v715 = vld [vmem:[%s205 + $0x6c8] sm:$0xff]
        %v716 = vld [vmem:[%s205 + $0x6d0] sm:$0xff]
        %v717 = vld [vmem:[%s205 + $0x6d8] sm:$0xff]
        %v718 = vld [vmem:[%s205 + $0x6e0] sm:$0xff]
        %v719 = vld [vmem:[%s205 + $0x6e8] sm:$0xff]
        %v720 = vld [vmem:[%s205 + $0x6f0] sm:$0xff]
        %v721 = vld [vmem:[%s205 + $0x6f8] sm:$0xff]
        %v722 = vld [vmem:[%s205 + $0x700] sm:$0xff]
        %v723 = vld [vmem:[%s205 + $0x708] sm:$0xff]
        %v724 = vld [vmem:[%s205 + $0x710] sm:$0xff]
        %v725 = vld [vmem:[%s205 + $0x718] sm:$0xff]
        %v726 = vld [vmem:[%s205 + $0x720] sm:$0xff]
        %v727 = vld [vmem:[%s205 + $0x728] sm:$0xff]
        %v728 = vld [vmem:[%s205 + $0x730] sm:$0xff]
        %v729 = vld [vmem:[%s205 + $0x738] sm:$0xff]
        %v730 = vld [vmem:[%s205 + $0x740] sm:$0xff]
        %v731 = vld [vmem:[%s205 + $0x748] sm:$0xff]
        %v732 = vld [vmem:[%s205 + $0x750] sm:$0xff]
        %v733 = vld [vmem:[%s205 + $0x758] sm:$0xff]
        %v734 = vld [vmem:[%s205 + $0x760] sm:$0xff]
        %v735 = vld [vmem:[%s205 + $0x768] sm:$0xff]
        %v736 = vld [vmem:[%s205 + $0x770] sm:$0xff]
        %v737 = vld [vmem:[%s205 + $0x778] sm:$0xff]
        %v738 = vld [vmem:[%s205 + $0x780] sm:$0xff]
        %v739 = vld [vmem:[%s205 + $0x788] sm:$0xff]
        %v740 = vld [vmem:[%s205 + $0x790] sm:$0xff]
        %v741 = vld [vmem:[%s205 + $0x798] sm:$0xff]
        %v742 = vld [vmem:[%s205 + $0x7a0] sm:$0xff]
        %v743 = vld [vmem:[%s205 + $0x7a8] sm:$0xff]
        %v744 = vld [vmem:[%s205 + $0x7b0] sm:$0xff]
        %v745 = vld [vmem:[%s205 + $0x7b8] sm:$0xff]
        %v746 = vld [vmem:[%s205 + $0x7c0] sm:$0xff]
        %v747 = vld [vmem:[%s205 + $0x7c8] sm:$0xff]
        %v748 = vld [vmem:[%s205 + $0x7d0] sm:$0xff]
        %v749 = vld [vmem:[%s205 + $0x7d8] sm:$0xff]
        %v750 = vld [vmem:[%s205 + $0x7e0] sm:$0xff]
        %v751 = vld [vmem:[%s205 + $0x7e8] sm:$0xff]
        %v752 = vld [vmem:[%s205 + $0x7f0] sm:$0xff]
        %v753 = vld [vmem:[%s205 + $0x7f8] sm:$0xff]
        %v754 = vsub.f32 %v242, %v498
        %v755 = vsub.f32 %v243, %v499
        %v756 = vsub.f32 %v244, %v500
        %v757 = vsub.f32 %v245, %v501
        %v758 = vsub.f32 %v246, %v502
        %v759 = vsub.f32 %v247, %v503
        %v760 = vsub.f32 %v248, %v504
        %v761 = vsub.f32 %v249, %v505
        %v762 = vsub.f32 %v250, %v506
        %v763 = vsub.f32 %v251, %v507
        %v764 = vsub.f32 %v252, %v508
        %v765 = vsub.f32 %v253, %v509
        %v766 = vsub.f32 %v254, %v510
        %v767 = vsub.f32 %v255, %v511
        %v768 = vsub.f32 %v256, %v512
        %v769 = vsub.f32 %v257, %v513
        %v770 = vsub.f32 %v258, %v514
        %v771 = vsub.f32 %v259, %v515
        %v772 = vsub.f32 %v260, %v516
        %v773 = vsub.f32 %v261, %v517
        %v774 = vsub.f32 %v262, %v518
        %v775 = vsub.f32 %v263, %v519
        %v776 = vsub.f32 %v264, %v520
        %v777 = vsub.f32 %v265, %v521
        %v778 = vsub.f32 %v266, %v522
        %v779 = vsub.f32 %v267, %v523
        %v780 = vsub.f32 %v268, %v524
        %v781 = vsub.f32 %v269, %v525
        %v782 = vsub.f32 %v270, %v526
        %v783 = vsub.f32 %v271, %v527
        %v784 = vsub.f32 %v272, %v528
        %v785 = vsub.f32 %v273, %v529
        %v786 = vsub.f32 %v274, %v530
        %v787 = vsub.f32 %v275, %v531
        %v788 = vsub.f32 %v276, %v532
        %v789 = vsub.f32 %v277, %v533
        %v790 = vsub.f32 %v278, %v534
        %v791 = vsub.f32 %v279, %v535
        %v792 = vsub.f32 %v280, %v536
        %v793 = vsub.f32 %v281, %v537
        %v794 = vsub.f32 %v282, %v538
        %v795 = vsub.f32 %v283, %v539
        %v796 = vsub.f32 %v284, %v540
        %v797 = vsub.f32 %v285, %v541
        %v798 = vsub.f32 %v286, %v542
        %v799 = vsub.f32 %v287, %v543
        %v800 = vsub.f32 %v288, %v544
        %v801 = vsub.f32 %v289, %v545
        %v802 = vsub.f32 %v290, %v546
        %v803 = vsub.f32 %v291, %v547
        %v804 = vsub.f32 %v292, %v548
        %v805 = vsub.f32 %v293, %v549
        %v806 = vsub.f32 %v294, %v550
        %v807 = vsub.f32 %v295, %v551
        %v808 = vsub.f32 %v296, %v552
        %v809 = vsub.f32 %v297, %v553
        %v810 = vsub.f32 %v298, %v554
        %v811 = vsub.f32 %v299, %v555
        %v812 = vsub.f32 %v300, %v556
        %v813 = vsub.f32 %v301, %v557
        %v814 = vsub.f32 %v302, %v558
        %v815 = vsub.f32 %v303, %v559
        %v816 = vsub.f32 %v304, %v560
        %v817 = vsub.f32 %v305, %v561
        %v818 = vsub.f32 %v306, %v562
        %v819 = vsub.f32 %v307, %v563
        %v820 = vsub.f32 %v308, %v564
        %v821 = vsub.f32 %v309, %v565
        %v822 = vsub.f32 %v310, %v566
        %v823 = vsub.f32 %v311, %v567
        %v824 = vsub.f32 %v312, %v568
        %v825 = vsub.f32 %v313, %v569
        %v826 = vsub.f32 %v314, %v570
        %v827 = vsub.f32 %v315, %v571
        %v828 = vsub.f32 %v316, %v572
        %v829 = vsub.f32 %v317, %v573
        %v830 = vsub.f32 %v318, %v574
        %v831 = vsub.f32 %v319, %v575
        %v832 = vsub.f32 %v320, %v576
        %v833 = vsub.f32 %v321, %v577
        %v834 = vsub.f32 %v322, %v578
        %v835 = vsub.f32 %v323, %v579
        %v836 = vsub.f32 %v324, %v580
        %v837 = vsub.f32 %v325, %v581
        %v838 = vsub.f32 %v326, %v582
        %v839 = vsub.f32 %v327, %v583
        %v840 = vsub.f32 %v328, %v584
        %v841 = vsub.f32 %v329, %v585
        %v842 = vsub.f32 %v330, %v586
        %v843 = vsub.f32 %v331, %v587
        %v844 = vsub.f32 %v332, %v588
        %v845 = vsub.f32 %v333, %v589
        %v846 = vsub.f32 %v334, %v590
        %v847 = vsub.f32 %v335, %v591
        %v848 = vsub.f32 %v336, %v592
        %v849 = vsub.f32 %v337, %v593
        %v850 = vsub.f32 %v338, %v594
        %v851 = vsub.f32 %v339, %v595
        %v852 = vsub.f32 %v340, %v596
        %v853 = vsub.f32 %v341, %v597
        %v854 = vsub.f32 %v342, %v598
        %v855 = vsub.f32 %v343, %v599
        %v856 = vsub.f32 %v344, %v600
        %v857 = vsub.f32 %v345, %v601
        %v858 = vsub.f32 %v346, %v602
        %v859 = vsub.f32 %v347, %v603
        %v860 = vsub.f32 %v348, %v604
        %v861 = vsub.f32 %v349, %v605
        %v862 = vsub.f32 %v350, %v606
        %v863 = vsub.f32 %v351, %v607
        %v864 = vsub.f32 %v352, %v608
        %v865 = vsub.f32 %v353, %v609
        %v866 = vsub.f32 %v354, %v610
        %v867 = vsub.f32 %v355, %v611
        %v868 = vsub.f32 %v356, %v612
        %v869 = vsub.f32 %v357, %v613
        %v870 = vsub.f32 %v358, %v614
        %v871 = vsub.f32 %v359, %v615
        %v872 = vsub.f32 %v360, %v616
        %v873 = vsub.f32 %v361, %v617
        %v874 = vsub.f32 %v362, %v618
        %v875 = vsub.f32 %v363, %v619
        %v876 = vsub.f32 %v364, %v620
        %v877 = vsub.f32 %v365, %v621
        %v878 = vsub.f32 %v366, %v622
        %v879 = vsub.f32 %v367, %v623
        %v880 = vsub.f32 %v368, %v624
        %v881 = vsub.f32 %v369, %v625
        %v882 = vsub.f32 %v370, %v626
        %v883 = vsub.f32 %v371, %v627
        %v884 = vsub.f32 %v372, %v628
        %v885 = vsub.f32 %v373, %v629
        %v886 = vsub.f32 %v374, %v630
        %v887 = vsub.f32 %v375, %v631
        %v888 = vsub.f32 %v376, %v632
        %v889 = vsub.f32 %v377, %v633
        %v890 = vsub.f32 %v378, %v634
        %v891 = vsub.f32 %v379, %v635
        %v892 = vsub.f32 %v380, %v636
        %v893 = vsub.f32 %v381, %v637
        %v894 = vsub.f32 %v382, %v638
        %v895 = vsub.f32 %v383, %v639
        %v896 = vsub.f32 %v384, %v640
        %v897 = vsub.f32 %v385, %v641
        %v898 = vsub.f32 %v386, %v642
        %v899 = vsub.f32 %v387, %v643
        %v900 = vsub.f32 %v388, %v644
        %v901 = vsub.f32 %v389, %v645
        %v902 = vsub.f32 %v390, %v646
        %v903 = vsub.f32 %v391, %v647
        %v904 = vsub.f32 %v392, %v648
        %v905 = vsub.f32 %v393, %v649
        %v906 = vsub.f32 %v394, %v650
        %v907 = vsub.f32 %v395, %v651
        %v908 = vsub.f32 %v396, %v652
        %v909 = vsub.f32 %v397, %v653
        %v910 = vsub.f32 %v398, %v654
        %v911 = vsub.f32 %v399, %v655
        %v912 = vsub.f32 %v400, %v656
        %v913 = vsub.f32 %v401, %v657
        %v914 = vsub.f32 %v402, %v658
        %v915 = vsub.f32 %v403, %v659
        %v916 = vsub.f32 %v404, %v660
        %v917 = vsub.f32 %v405, %v661
        %v918 = vsub.f32 %v406, %v662
        %v919 = vsub.f32 %v407, %v663
        %v920 = vsub.f32 %v408, %v664
        %v921 = vsub.f32 %v409, %v665
        %v922 = vsub.f32 %v410, %v666
        %v923 = vsub.f32 %v411, %v667
        %v924 = vsub.f32 %v412, %v668
        %v925 = vsub.f32 %v413, %v669
        %v926 = vsub.f32 %v414, %v670
        %v927 = vsub.f32 %v415, %v671
        %v928 = vsub.f32 %v416, %v672
        %v929 = vsub.f32 %v417, %v673
        %v930 = vsub.f32 %v418, %v674
        %v931 = vsub.f32 %v419, %v675
        %v932 = vsub.f32 %v420, %v676
        %v933 = vsub.f32 %v421, %v677
        %v934 = vsub.f32 %v422, %v678
        %v935 = vsub.f32 %v423, %v679
        %v936 = vsub.f32 %v424, %v680
        %v937 = vsub.f32 %v425, %v681
        %v938 = vsub.f32 %v426, %v682
        %v939 = vsub.f32 %v427, %v683
        %v940 = vsub.f32 %v428, %v684
        %v941 = vsub.f32 %v429, %v685
        %v942 = vsub.f32 %v430, %v686
        %v943 = vsub.f32 %v431, %v687
        %v944 = vsub.f32 %v432, %v688
        %v945 = vsub.f32 %v433, %v689
        %v946 = vsub.f32 %v434, %v690
        %v947 = vsub.f32 %v435, %v691
        %v948 = vsub.f32 %v436, %v692
        %v949 = vsub.f32 %v437, %v693
        %v950 = vsub.f32 %v438, %v694
        %v951 = vsub.f32 %v439, %v695
        %v952 = vsub.f32 %v440, %v696
        %v953 = vsub.f32 %v441, %v697
        %v954 = vsub.f32 %v442, %v698
        %v955 = vsub.f32 %v443, %v699
        %v956 = vsub.f32 %v444, %v700
        %v957 = vsub.f32 %v445, %v701
        %v958 = vsub.f32 %v446, %v702
        %v959 = vsub.f32 %v447, %v703
        %v960 = vsub.f32 %v448, %v704
        %v961 = vsub.f32 %v449, %v705
        %v962 = vsub.f32 %v450, %v706
        %v963 = vsub.f32 %v451, %v707
        %v964 = vsub.f32 %v452, %v708
        %v965 = vsub.f32 %v453, %v709
        %v966 = vsub.f32 %v454, %v710
        %v967 = vsub.f32 %v455, %v711
        %v968 = vsub.f32 %v456, %v712
        %v969 = vsub.f32 %v457, %v713
        %v970 = vsub.f32 %v458, %v714
        %v971 = vsub.f32 %v459, %v715
        %v972 = vsub.f32 %v460, %v716
        %v973 = vsub.f32 %v461, %v717
        %v974 = vsub.f32 %v462, %v718
        %v975 = vsub.f32 %v463, %v719
        %v976 = vsub.f32 %v464, %v720
        %v977 = vsub.f32 %v465, %v721
        %v978 = vsub.f32 %v466, %v722
        %v979 = vsub.f32 %v467, %v723
        %v980 = vsub.f32 %v468, %v724
        %v981 = vsub.f32 %v469, %v725
        %v982 = vsub.f32 %v470, %v726
        %v983 = vsub.f32 %v471, %v727
        %v984 = vsub.f32 %v472, %v728
        %v985 = vsub.f32 %v473, %v729
        %v986 = vsub.f32 %v474, %v730
        %v987 = vsub.f32 %v475, %v731
        %v988 = vsub.f32 %v476, %v732
        %v989 = vsub.f32 %v477, %v733
        %v990 = vsub.f32 %v478, %v734
        %v991 = vsub.f32 %v479, %v735
        %v992 = vsub.f32 %v480, %v736
        %v993 = vsub.f32 %v481, %v737
        %v994 = vsub.f32 %v482, %v738
        %v995 = vsub.f32 %v483, %v739
        %v996 = vsub.f32 %v484, %v740
        %v997 = vsub.f32 %v485, %v741
        %v998 = vsub.f32 %v486, %v742
        %v999 = vsub.f32 %v487, %v743
        %v1000 = vsub.f32 %v488, %v744
        %v1001 = vsub.f32 %v489, %v745
        %v1002 = vsub.f32 %v490, %v746
        %v1003 = vsub.f32 %v491, %v747
        %v1004 = vsub.f32 %v492, %v748
        %v1005 = vsub.f32 %v493, %v749
        %v1006 = vsub.f32 %v494, %v750
        %v1007 = vsub.f32 %v495, %v751
        %v1008 = vsub.f32 %v496, %v752
        %v1009 = vsub.f32 %v497, %v753
        %v1010 = vand.u32 2147483647, %v754
        %v1011 = vand.u32 2147483647, %v755
        %v1012 = vand.u32 2147483647, %v756
        %v1013 = vand.u32 2147483647, %v757
        %v1014 = vand.u32 2147483647, %v758
        %v1015 = vand.u32 2147483647, %v759
        %v1016 = vand.u32 2147483647, %v760
        %v1017 = vand.u32 2147483647, %v761
        %v1018 = vand.u32 2147483647, %v762
        %v1019 = vand.u32 2147483647, %v763
        %v1020 = vand.u32 2147483647, %v764
        %v1021 = vand.u32 2147483647, %v765
        %v1022 = vand.u32 2147483647, %v766
        %v1023 = vand.u32 2147483647, %v767
        %v1024 = vand.u32 2147483647, %v768
        %v1025 = vand.u32 2147483647, %v769
        %v1026 = vand.u32 2147483647, %v770
        %v1027 = vand.u32 2147483647, %v771
        %v1028 = vand.u32 2147483647, %v772
        %v1029 = vand.u32 2147483647, %v773
        %v1030 = vand.u32 2147483647, %v774
        %v1031 = vand.u32 2147483647, %v775
        %v1032 = vand.u32 2147483647, %v776
        %v1033 = vand.u32 2147483647, %v777
        %v1034 = vand.u32 2147483647, %v778
        %v1035 = vand.u32 2147483647, %v779
        %v1036 = vand.u32 2147483647, %v780
        %v1037 = vand.u32 2147483647, %v781
        %v1038 = vand.u32 2147483647, %v782
        %v1039 = vand.u32 2147483647, %v783
        %v1040 = vand.u32 2147483647, %v784
        %v1041 = vand.u32 2147483647, %v785
        %v1042 = vand.u32 2147483647, %v786
        %v1043 = vand.u32 2147483647, %v787
        %v1044 = vand.u32 2147483647, %v788
        %v1045 = vand.u32 2147483647, %v789
        %v1046 = vand.u32 2147483647, %v790
        %v1047 = vand.u32 2147483647, %v791
        %v1048 = vand.u32 2147483647, %v792
        %v1049 = vand.u32 2147483647, %v793
        %v1050 = vand.u32 2147483647, %v794
        %v1051 = vand.u32 2147483647, %v795
        %v1052 = vand.u32 2147483647, %v796
        %v1053 = vand.u32 2147483647, %v797
        %v1054 = vand.u32 2147483647, %v798
        %v1055 = vand.u32 2147483647, %v799
        %v1056 = vand.u32 2147483647, %v800
        %v1057 = vand.u32 2147483647, %v801
        %v1058 = vand.u32 2147483647, %v802
        %v1059 = vand.u32 2147483647, %v803
        %v1060 = vand.u32 2147483647, %v804
        %v1061 = vand.u32 2147483647, %v805
        %v1062 = vand.u32 2147483647, %v806
        %v1063 = vand.u32 2147483647, %v807
        %v1064 = vand.u32 2147483647, %v808
        %v1065 = vand.u32 2147483647, %v809
        %v1066 = vand.u32 2147483647, %v810
        %v1067 = vand.u32 2147483647, %v811
        %v1068 = vand.u32 2147483647, %v812
        %v1069 = vand.u32 2147483647, %v813
        %v1070 = vand.u32 2147483647, %v814
        %v1071 = vand.u32 2147483647, %v815
        %v1072 = vand.u32 2147483647, %v816
        %v1073 = vand.u32 2147483647, %v817
        %v1074 = vand.u32 2147483647, %v818
        %v1075 = vand.u32 2147483647, %v819
        %v1076 = vand.u32 2147483647, %v820
        %v1077 = vand.u32 2147483647, %v821
        %v1078 = vand.u32 2147483647, %v822
        %v1079 = vand.u32 2147483647, %v823
        %v1080 = vand.u32 2147483647, %v824
        %v1081 = vand.u32 2147483647, %v825
        %v1082 = vand.u32 2147483647, %v826
        %v1083 = vand.u32 2147483647, %v827
        %v1084 = vand.u32 2147483647, %v828
        %v1085 = vand.u32 2147483647, %v829
        %v1086 = vand.u32 2147483647, %v830
        %v1087 = vand.u32 2147483647, %v831
        %v1088 = vand.u32 2147483647, %v832
        %v1089 = vand.u32 2147483647, %v833
        %v1090 = vand.u32 2147483647, %v834
        %v1091 = vand.u32 2147483647, %v835
        %v1092 = vand.u32 2147483647, %v836
        %v1093 = vand.u32 2147483647, %v837
        %v1094 = vand.u32 2147483647, %v838
        %v1095 = vand.u32 2147483647, %v839
        %v1096 = vand.u32 2147483647, %v840
        %v1097 = vand.u32 2147483647, %v841
        %v1098 = vand.u32 2147483647, %v842
        %v1099 = vand.u32 2147483647, %v843
        %v1100 = vand.u32 2147483647, %v844
        %v1101 = vand.u32 2147483647, %v845
        %v1102 = vand.u32 2147483647, %v846
        %v1103 = vand.u32 2147483647, %v847
        %v1104 = vand.u32 2147483647, %v848
        %v1105 = vand.u32 2147483647, %v849
        %v1106 = vand.u32 2147483647, %v850
        %v1107 = vand.u32 2147483647, %v851
        %v1108 = vand.u32 2147483647, %v852
        %v1109 = vand.u32 2147483647, %v853
        %v1110 = vand.u32 2147483647, %v854
        %v1111 = vand.u32 2147483647, %v855
        %v1112 = vand.u32 2147483647, %v856
        %v1113 = vand.u32 2147483647, %v857
        %v1114 = vand.u32 2147483647, %v858
        %v1115 = vand.u32 2147483647, %v859
        %v1116 = vand.u32 2147483647, %v860
        %v1117 = vand.u32 2147483647, %v861
        %v1118 = vand.u32 2147483647, %v862
        %v1119 = vand.u32 2147483647, %v863
        %v1120 = vand.u32 2147483647, %v864
        %v1121 = vand.u32 2147483647, %v865
        %v1122 = vand.u32 2147483647, %v866
        %v1123 = vand.u32 2147483647, %v867
        %v1124 = vand.u32 2147483647, %v868
        %v1125 = vand.u32 2147483647, %v869
        %v1126 = vand.u32 2147483647, %v870
        %v1127 = vand.u32 2147483647, %v871
        %v1128 = vand.u32 2147483647, %v872
        %v1129 = vand.u32 2147483647, %v873
        %v1130 = vand.u32 2147483647, %v874
        %v1131 = vand.u32 2147483647, %v875
        %v1132 = vand.u32 2147483647, %v876
        %v1133 = vand.u32 2147483647, %v877
        %v1134 = vand.u32 2147483647, %v878
        %v1135 = vand.u32 2147483647, %v879
        %v1136 = vand.u32 2147483647, %v880
        %v1137 = vand.u32 2147483647, %v881
        %v1138 = vand.u32 2147483647, %v882
        %v1139 = vand.u32 2147483647, %v883
        %v1140 = vand.u32 2147483647, %v884
        %v1141 = vand.u32 2147483647, %v885
        %v1142 = vand.u32 2147483647, %v886
        %v1143 = vand.u32 2147483647, %v887
        %v1144 = vand.u32 2147483647, %v888
        %v1145 = vand.u32 2147483647, %v889
        %v1146 = vand.u32 2147483647, %v890
        %v1147 = vand.u32 2147483647, %v891
        %v1148 = vand.u32 2147483647, %v892
        %v1149 = vand.u32 2147483647, %v893
        %v1150 = vand.u32 2147483647, %v894
        %v1151 = vand.u32 2147483647, %v895
        %v1152 = vand.u32 2147483647, %v896
        %v1153 = vand.u32 2147483647, %v897
        %v1154 = vand.u32 2147483647, %v898
        %v1155 = vand.u32 2147483647, %v899
        %v1156 = vand.u32 2147483647, %v900
        %v1157 = vand.u32 2147483647, %v901
        %v1158 = vand.u32 2147483647, %v902
        %v1159 = vand.u32 2147483647, %v903
        %v1160 = vand.u32 2147483647, %v904
        %v1161 = vand.u32 2147483647, %v905
        %v1162 = vand.u32 2147483647, %v906
        %v1163 = vand.u32 2147483647, %v907
        %v1164 = vand.u32 2147483647, %v908
        %v1165 = vand.u32 2147483647, %v909
        %v1166 = vand.u32 2147483647, %v910
        %v1167 = vand.u32 2147483647, %v911
        %v1168 = vand.u32 2147483647, %v912
        %v1169 = vand.u32 2147483647, %v913
        %v1170 = vand.u32 2147483647, %v914
        %v1171 = vand.u32 2147483647, %v915
        %v1172 = vand.u32 2147483647, %v916
        %v1173 = vand.u32 2147483647, %v917
        %v1174 = vand.u32 2147483647, %v918
        %v1175 = vand.u32 2147483647, %v919
        %v1176 = vand.u32 2147483647, %v920
        %v1177 = vand.u32 2147483647, %v921
        %v1178 = vand.u32 2147483647, %v922
        %v1179 = vand.u32 2147483647, %v923
        %v1180 = vand.u32 2147483647, %v924
        %v1181 = vand.u32 2147483647, %v925
        %v1182 = vand.u32 2147483647, %v926
        %v1183 = vand.u32 2147483647, %v927
        %v1184 = vand.u32 2147483647, %v928
        %v1185 = vand.u32 2147483647, %v929
        %v1186 = vand.u32 2147483647, %v930
        %v1187 = vand.u32 2147483647, %v931
        %v1188 = vand.u32 2147483647, %v932
        %v1189 = vand.u32 2147483647, %v933
        %v1190 = vand.u32 2147483647, %v934
        %v1191 = vand.u32 2147483647, %v935
        %v1192 = vand.u32 2147483647, %v936
        %v1193 = vand.u32 2147483647, %v937
        %v1194 = vand.u32 2147483647, %v938
        %v1195 = vand.u32 2147483647, %v939
        %v1196 = vand.u32 2147483647, %v940
        %v1197 = vand.u32 2147483647, %v941
        %v1198 = vand.u32 2147483647, %v942
        %v1199 = vand.u32 2147483647, %v943
        %v1200 = vand.u32 2147483647, %v944
        %v1201 = vand.u32 2147483647, %v945
        %v1202 = vand.u32 2147483647, %v946
        %v1203 = vand.u32 2147483647, %v947
        %v1204 = vand.u32 2147483647, %v948
        %v1205 = vand.u32 2147483647, %v949
        %v1206 = vand.u32 2147483647, %v950
        %v1207 = vand.u32 2147483647, %v951
        %v1208 = vand.u32 2147483647, %v952
        %v1209 = vand.u32 2147483647, %v953
        %v1210 = vand.u32 2147483647, %v954
        %v1211 = vand.u32 2147483647, %v955
        %v1212 = vand.u32 2147483647, %v956
        %v1213 = vand.u32 2147483647, %v957
        %v1214 = vand.u32 2147483647, %v958
        %v1215 = vand.u32 2147483647, %v959
        %v1216 = vand.u32 2147483647, %v960
        %v1217 = vand.u32 2147483647, %v961
        %v1218 = vand.u32 2147483647, %v962
        %v1219 = vand.u32 2147483647, %v963
        %v1220 = vand.u32 2147483647, %v964
        %v1221 = vand.u32 2147483647, %v965
        %v1222 = vand.u32 2147483647, %v966
        %v1223 = vand.u32 2147483647, %v967
        %v1224 = vand.u32 2147483647, %v968
        %v1225 = vand.u32 2147483647, %v969
        %v1226 = vand.u32 2147483647, %v970
        %v1227 = vand.u32 2147483647, %v971
        %v1228 = vand.u32 2147483647, %v972
        %v1229 = vand.u32 2147483647, %v973
        %v1230 = vand.u32 2147483647, %v974
        %v1231 = vand.u32 2147483647, %v975
        %v1232 = vand.u32 2147483647, %v976
        %v1233 = vand.u32 2147483647, %v977
        %v1234 = vand.u32 2147483647, %v978
        %v1235 = vand.u32 2147483647, %v979
        %v1236 = vand.u32 2147483647, %v980
        %v1237 = vand.u32 2147483647, %v981
        %v1238 = vand.u32 2147483647, %v982
        %v1239 = vand.u32 2147483647, %v983
        %v1240 = vand.u32 2147483647, %v984
        %v1241 = vand.u32 2147483647, %v985
        %v1242 = vand.u32 2147483647, %v986
        %v1243 = vand.u32 2147483647, %v987
        %v1244 = vand.u32 2147483647, %v988
        %v1245 = vand.u32 2147483647, %v989
        %v1246 = vand.u32 2147483647, %v990
        %v1247 = vand.u32 2147483647, %v991
        %v1248 = vand.u32 2147483647, %v992
        %v1249 = vand.u32 2147483647, %v993
        %v1250 = vand.u32 2147483647, %v994
        %v1251 = vand.u32 2147483647, %v995
        %v1252 = vand.u32 2147483647, %v996
        %v1253 = vand.u32 2147483647, %v997
        %v1254 = vand.u32 2147483647, %v998
        %v1255 = vand.u32 2147483647, %v999
        %v1256 = vand.u32 2147483647, %v1000
        %v1257 = vand.u32 2147483647, %v1001
        %v1258 = vand.u32 2147483647, %v1002
        %v1259 = vand.u32 2147483647, %v1003
        %v1260 = vand.u32 2147483647, %v1004
        %v1261 = vand.u32 2147483647, %v1005
        %v1262 = vand.u32 2147483647, %v1006
        %v1263 = vand.u32 2147483647, %v1007
        %v1264 = vand.u32 2147483647, %v1008
        %v1265 = vand.u32 2147483647, %v1009
        %v1266 = vadd.f32 %v1010, %v1011
        %v1267 = vadd.f32 %v1266, %v1012
        %v1268 = vadd.f32 %v1267, %v1013
        %v1269 = vadd.f32 %v1268, %v1014
        %v1270 = vadd.f32 %v1269, %v1015
        %v1271 = vadd.f32 %v1270, %v1016
        %v1272 = vadd.f32 %v1271, %v1017
        %v1273 = vadd.f32 %v1272, %v1018
        %v1274 = vadd.f32 %v1273, %v1019
        %v1275 = vadd.f32 %v1274, %v1020
        %v1276 = vadd.f32 %v1275, %v1021
        %v1277 = vadd.f32 %v1276, %v1022
        %v1278 = vadd.f32 %v1277, %v1023
        %v1279 = vadd.f32 %v1278, %v1024
        %v1280 = vadd.f32 %v1279, %v1025
        %v1281 = vadd.f32 %v1280, %v1026
        %v1282 = vadd.f32 %v1281, %v1027
        %v1283 = vadd.f32 %v1282, %v1028
        %v1284 = vadd.f32 %v1283, %v1029
        %v1285 = vadd.f32 %v1284, %v1030
        %v1286 = vadd.f32 %v1285, %v1031
        %v1287 = vadd.f32 %v1286, %v1032
        %v1288 = vadd.f32 %v1287, %v1033
        %v1289 = vadd.f32 %v1288, %v1034
        %v1290 = vadd.f32 %v1289, %v1035
        %v1291 = vadd.f32 %v1290, %v1036
        %v1292 = vadd.f32 %v1291, %v1037
        %v1293 = vadd.f32 %v1292, %v1038
        %v1294 = vadd.f32 %v1293, %v1039
        %v1295 = vadd.f32 %v1294, %v1040
        %v1296 = vadd.f32 %v1295, %v1041
        %v1297 = vadd.f32 %v1296, %v1042
        %v1298 = vadd.f32 %v1297, %v1043
        %v1299 = vadd.f32 %v1298, %v1044
        %v1300 = vadd.f32 %v1299, %v1045
        %v1301 = vadd.f32 %v1300, %v1046
        %v1302 = vadd.f32 %v1301, %v1047
        %v1303 = vadd.f32 %v1302, %v1048
        %v1304 = vadd.f32 %v1303, %v1049
        %v1305 = vadd.f32 %v1304, %v1050
        %v1306 = vadd.f32 %v1305, %v1051
        %v1307 = vadd.f32 %v1306, %v1052
        %v1308 = vadd.f32 %v1307, %v1053
        %v1309 = vadd.f32 %v1308, %v1054
        %v1310 = vadd.f32 %v1309, %v1055
        %v1311 = vadd.f32 %v1310, %v1056
        %v1312 = vadd.f32 %v1311, %v1057
        %v1313 = vadd.f32 %v1312, %v1058
        %v1314 = vadd.f32 %v1313, %v1059
        %v1315 = vadd.f32 %v1314, %v1060
        %v1316 = vadd.f32 %v1315, %v1061
        %v1317 = vadd.f32 %v1316, %v1062
        %v1318 = vadd.f32 %v1317, %v1063
        %v1319 = vadd.f32 %v1318, %v1064
        %v1320 = vadd.f32 %v1319, %v1065
        %v1321 = vadd.f32 %v1320, %v1066
        %v1322 = vadd.f32 %v1321, %v1067
        %v1323 = vadd.f32 %v1322, %v1068
        %v1324 = vadd.f32 %v1323, %v1069
        %v1325 = vadd.f32 %v1324, %v1070
        %v1326 = vadd.f32 %v1325, %v1071
        %v1327 = vadd.f32 %v1326, %v1072
        %v1328 = vadd.f32 %v1327, %v1073
        %v1329 = vadd.f32 %v1328, %v1074
        %v1330 = vadd.f32 %v1329, %v1075
        %v1331 = vadd.f32 %v1330, %v1076
        %v1332 = vadd.f32 %v1331, %v1077
        %v1333 = vadd.f32 %v1332, %v1078
        %v1334 = vadd.f32 %v1333, %v1079
        %v1335 = vadd.f32 %v1334, %v1080
        %v1336 = vadd.f32 %v1335, %v1081
        %v1337 = vadd.f32 %v1336, %v1082
        %v1338 = vadd.f32 %v1337, %v1083
        %v1339 = vadd.f32 %v1338, %v1084
        %v1340 = vadd.f32 %v1339, %v1085
        %v1341 = vadd.f32 %v1340, %v1086
        %v1342 = vadd.f32 %v1341, %v1087
        %v1343 = vadd.f32 %v1342, %v1088
        %v1344 = vadd.f32 %v1343, %v1089
        %v1345 = vadd.f32 %v1344, %v1090
        %v1346 = vadd.f32 %v1345, %v1091
        %v1347 = vadd.f32 %v1346, %v1092
        %v1348 = vadd.f32 %v1347, %v1093
        %v1349 = vadd.f32 %v1348, %v1094
        %v1350 = vadd.f32 %v1349, %v1095
        %v1351 = vadd.f32 %v1350, %v1096
        %v1352 = vadd.f32 %v1351, %v1097
        %v1353 = vadd.f32 %v1352, %v1098
        %v1354 = vadd.f32 %v1353, %v1099
        %v1355 = vadd.f32 %v1354, %v1100
        %v1356 = vadd.f32 %v1355, %v1101
        %v1357 = vadd.f32 %v1356, %v1102
        %v1358 = vadd.f32 %v1357, %v1103
        %v1359 = vadd.f32 %v1358, %v1104
        %v1360 = vadd.f32 %v1359, %v1105
        %v1361 = vadd.f32 %v1360, %v1106
        %v1362 = vadd.f32 %v1361, %v1107
        %v1363 = vadd.f32 %v1362, %v1108
        %v1364 = vadd.f32 %v1363, %v1109
        %v1365 = vadd.f32 %v1364, %v1110
        %v1366 = vadd.f32 %v1365, %v1111
        %v1367 = vadd.f32 %v1366, %v1112
        %v1368 = vadd.f32 %v1367, %v1113
        %v1369 = vadd.f32 %v1368, %v1114
        %v1370 = vadd.f32 %v1369, %v1115
        %v1371 = vadd.f32 %v1370, %v1116
        %v1372 = vadd.f32 %v1371, %v1117
        %v1373 = vadd.f32 %v1372, %v1118
        %v1374 = vadd.f32 %v1373, %v1119
        %v1375 = vadd.f32 %v1374, %v1120
        %v1376 = vadd.f32 %v1375, %v1121
        %v1377 = vadd.f32 %v1376, %v1122
        %v1378 = vadd.f32 %v1377, %v1123
        %v1379 = vadd.f32 %v1378, %v1124
        %v1380 = vadd.f32 %v1379, %v1125
        %v1381 = vadd.f32 %v1380, %v1126
        %v1382 = vadd.f32 %v1381, %v1127
        %v1383 = vadd.f32 %v1382, %v1128
        %v1384 = vadd.f32 %v1383, %v1129
        %v1385 = vadd.f32 %v1384, %v1130
        %v1386 = vadd.f32 %v1385, %v1131
        %v1387 = vadd.f32 %v1386, %v1132
        %v1388 = vadd.f32 %v1387, %v1133
        %v1389 = vadd.f32 %v1388, %v1134
        %v1390 = vadd.f32 %v1389, %v1135
        %v1391 = vadd.f32 %v1390, %v1136
        %v1392 = vadd.f32 %v1391, %v1137
        %v1393 = vadd.f32 %v1392, %v1138
        %v1394 = vadd.f32 %v1393, %v1139
        %v1395 = vadd.f32 %v1394, %v1140
        %v1396 = vadd.f32 %v1395, %v1141
        %v1397 = vadd.f32 %v1396, %v1142
        %v1398 = vadd.f32 %v1397, %v1143
        %v1399 = vadd.f32 %v1398, %v1144
        %v1400 = vadd.f32 %v1399, %v1145
        %v1401 = vadd.f32 %v1400, %v1146
        %v1402 = vadd.f32 %v1401, %v1147
        %v1403 = vadd.f32 %v1402, %v1148
        %v1404 = vadd.f32 %v1403, %v1149
        %v1405 = vadd.f32 %v1404, %v1150
        %v1406 = vadd.f32 %v1405, %v1151
        %v1407 = vadd.f32 %v1406, %v1152
        %v1408 = vadd.f32 %v1407, %v1153
        %v1409 = vadd.f32 %v1408, %v1154
        %v1410 = vadd.f32 %v1409, %v1155
        %v1411 = vadd.f32 %v1410, %v1156
        %v1412 = vadd.f32 %v1411, %v1157
        %v1413 = vadd.f32 %v1412, %v1158
        %v1414 = vadd.f32 %v1413, %v1159
        %v1415 = vadd.f32 %v1414, %v1160
        %v1416 = vadd.f32 %v1415, %v1161
        %v1417 = vadd.f32 %v1416, %v1162
        %v1418 = vadd.f32 %v1417, %v1163
        %v1419 = vadd.f32 %v1418, %v1164
        %v1420 = vadd.f32 %v1419, %v1165
        %v1421 = vadd.f32 %v1420, %v1166
        %v1422 = vadd.f32 %v1421, %v1167
        %v1423 = vadd.f32 %v1422, %v1168
        %v1424 = vadd.f32 %v1423, %v1169
        %v1425 = vadd.f32 %v1424, %v1170
        %v1426 = vadd.f32 %v1425, %v1171
        %v1427 = vadd.f32 %v1426, %v1172
        %v1428 = vadd.f32 %v1427, %v1173
        %v1429 = vadd.f32 %v1428, %v1174
        %v1430 = vadd.f32 %v1429, %v1175
        %v1431 = vadd.f32 %v1430, %v1176
        %v1432 = vadd.f32 %v1431, %v1177
        %v1433 = vadd.f32 %v1432, %v1178
        %v1434 = vadd.f32 %v1433, %v1179
        %v1435 = vadd.f32 %v1434, %v1180
        %v1436 = vadd.f32 %v1435, %v1181
        %v1437 = vadd.f32 %v1436, %v1182
        %v1438 = vadd.f32 %v1437, %v1183
        %v1439 = vadd.f32 %v1438, %v1184
        %v1440 = vadd.f32 %v1439, %v1185
        %v1441 = vadd.f32 %v1440, %v1186
        %v1442 = vadd.f32 %v1441, %v1187
        %v1443 = vadd.f32 %v1442, %v1188
        %v1444 = vadd.f32 %v1443, %v1189
        %v1445 = vadd.f32 %v1444, %v1190
        %v1446 = vadd.f32 %v1445, %v1191
        %v1447 = vadd.f32 %v1446, %v1192
        %v1448 = vadd.f32 %v1447, %v1193
        %v1449 = vadd.f32 %v1448, %v1194
        %v1450 = vadd.f32 %v1449, %v1195
        %v1451 = vadd.f32 %v1450, %v1196
        %v1452 = vadd.f32 %v1451, %v1197
        %v1453 = vadd.f32 %v1452, %v1198
        %v1454 = vadd.f32 %v1453, %v1199
        %v1455 = vadd.f32 %v1454, %v1200
        %v1456 = vadd.f32 %v1455, %v1201
        %v1457 = vadd.f32 %v1456, %v1202
        %v1458 = vadd.f32 %v1457, %v1203
        %v1459 = vadd.f32 %v1458, %v1204
        %v1460 = vadd.f32 %v1459, %v1205
        %v1461 = vadd.f32 %v1460, %v1206
        %v1462 = vadd.f32 %v1461, %v1207
        %v1463 = vadd.f32 %v1462, %v1208
        %v1464 = vadd.f32 %v1463, %v1209
        %v1465 = vadd.f32 %v1464, %v1210
        %v1466 = vadd.f32 %v1465, %v1211
        %v1467 = vadd.f32 %v1466, %v1212
        %v1468 = vadd.f32 %v1467, %v1213
        %v1469 = vadd.f32 %v1468, %v1214
        %v1470 = vadd.f32 %v1469, %v1215
        %v1471 = vadd.f32 %v1470, %v1216
        %v1472 = vadd.f32 %v1471, %v1217
        %v1473 = vadd.f32 %v1472, %v1218
        %v1474 = vadd.f32 %v1473, %v1219
        %v1475 = vadd.f32 %v1474, %v1220
        %v1476 = vadd.f32 %v1475, %v1221
        %v1477 = vadd.f32 %v1476, %v1222
        %v1478 = vadd.f32 %v1477, %v1223
        %v1479 = vadd.f32 %v1478, %v1224
        %v1480 = vadd.f32 %v1479, %v1225
        %v1481 = vadd.f32 %v1480, %v1226
        %v1482 = vadd.f32 %v1481, %v1227
        %v1483 = vadd.f32 %v1482, %v1228
        %v1484 = vadd.f32 %v1483, %v1229
        %v1485 = vadd.f32 %v1484, %v1230
        %v1486 = vadd.f32 %v1485, %v1231
        %v1487 = vadd.f32 %v1486, %v1232
        %v1488 = vadd.f32 %v1487, %v1233
        %v1489 = vadd.f32 %v1488, %v1234
        %v1490 = vadd.f32 %v1489, %v1235
        %v1491 = vadd.f32 %v1490, %v1236
        %v1492 = vadd.f32 %v1491, %v1237
        %v1493 = vadd.f32 %v1492, %v1238
        %v1494 = vadd.f32 %v1493, %v1239
        %v1495 = vadd.f32 %v1494, %v1240
        %v1496 = vadd.f32 %v1495, %v1241
        %v1497 = vadd.f32 %v1496, %v1242
        %v1498 = vadd.f32 %v1497, %v1243
        %v1499 = vadd.f32 %v1498, %v1244
        %v1500 = vadd.f32 %v1499, %v1245
        %v1501 = vadd.f32 %v1500, %v1246
        %v1502 = vadd.f32 %v1501, %v1247
        %v1503 = vadd.f32 %v1502, %v1248
        %v1504 = vadd.f32 %v1503, %v1249
        %v1505 = vadd.f32 %v1504, %v1250
        %v1506 = vadd.f32 %v1505, %v1251
        %v1507 = vadd.f32 %v1506, %v1252
        %v1508 = vadd.f32 %v1507, %v1253
        %v1509 = vadd.f32 %v1508, %v1254
        %v1510 = vadd.f32 %v1509, %v1255
        %v1511 = vadd.f32 %v1510, %v1256
        %v1512 = vadd.f32 %v1511, %v1257
        %v1513 = vadd.f32 %v1512, %v1258
        %v1514 = vadd.f32 %v1513, %v1259
        %v1515 = vadd.f32 %v1514, %v1260
        %v1516 = vadd.f32 %v1515, %v1261
        %v1517 = vadd.f32 %v1516, %v1262
        %v1518 = vadd.f32 %v1517, %v1263
        %v1519 = vadd.f32 %v1518, %v1264
        %v1520 = vadd.f32 %v1519, %v1265
        %s1521 = smul.u32 %s31, 3
        %s1522 = sadd.s32 %s1521, %s32
        %v1523 = vld [vmem:[%s230] sm:$0xff]
        %s1524 = sld [smem:[#allocation3 + %s1522]]
        %v1525 = vstv %s1524
        %v1526 = vmul.f32 %v1525, %v1520
        %v1527 = vadd.f32 %v1523, %v1526
        %1528 = vst [vmem:[%s230] sm:$0xff] %v1527
        %s1529 = sand.u32 %s107, 1
        %s1530 = scalar_lea.sflag [#allocation6], %s1529
        %s1531 = sand.u32 %s107, 1
        %s1532 = smul.addr %s1531, 8
        %s1533 = scalar_lea.vmem [#allocation9], %s1532
        // Predicated region
        $region41: #{tpu_custom_call.1} parent=27 // pred_check
          %p1534 = pneg %p117
        $region42: #{tpu_custom_call.1} parent=27 // pred_check_branch
          %1536 = sbr.rel (%p1534) target = $region44
        $region43: #{tpu_custom_call.1} parent=27 // pred_region
          %s1538 = ssub.s32 128, 128
          %1539 = vsyncadd %s1530, %s1538
          %s1540 = smul.addr %s31, 128
          %s1541 = scalar_lea.hbm %s3, %s1540
          %s1543 = sshll.u32 %s1533, 4
          %s1544 = int_to_ptr.vmem [resolvable:$true] %s1543
          %1546 = dma.vmem_to_hbm [thread:$0]  %s1544, 128, %s1541, %s1530
        $region44: #{tpu_custom_call.1} parent=27 // pred_fallthru
          _
      $region28: #{tpu_custom_call.1} parent=5 // pred_fallthru
        _
      %p1547 = scmp.le.s32.totalorder 2, %s22
      // Predicated region
      $region45: #{tpu_custom_call.1} parent=5 // pred_check
        %p1548 = pneg %p1547
      $region46: #{tpu_custom_call.1} parent=5 // pred_check_branch
        %1550 = sbr.rel (%p1548) target = $region48
      $region47: #{tpu_custom_call.1} parent=5 // pred_region
        %s1551 = ssub.s32 %s22, 2
        // Predicated region
        $region49: #{tpu_custom_call.1} parent=47 // pred_check
          %p1552 = pneg %p123
        $region50: #{tpu_custom_call.1} parent=47 // pred_check_branch
          %1554 = sbr.rel (%p1552) target = $region52
        $region51: #{tpu_custom_call.1} parent=47 // pred_region
          %s1555 = sand.u32 %s108, 1
          %s1556 = scalar_lea.sflag [#allocation6], %s1555
          %s1557 = sand.u32 %s108, 1
          %s1558 = smul.addr %s1557, 8
          %s1559 = scalar_lea.vmem [#allocation9], %s1558
          %1560 = dma.done %s1556, 128
        $region52: #{tpu_custom_call.1} parent=47 // pred_fallthru
          _
      $region48: #{tpu_custom_call.1} parent=5 // pred_fallthru
        _
    $region6: #{tpu_custom_call.1} parent=1 // loop_footer
      %s26 = sadd.s32 1, %s22
    $region7: #{tpu_custom_call.1} parent=1 // loop_footer_branch
      %21 = sbr.rel target = $region3
    $region8: #{tpu_custom_call.1} parent=1 // loop_exit
      _
    %1561 = vsyncpa [#allocation5], 1
    %s1562 = scalar_lea.sflag [#allocation5], 1
    %1563 = vsyncpa %s1562, 1
    %1564 = vsyncpa [#allocation8], 1
    %s1565 = scalar_lea.sflag [#allocation8], 1
    %1566 = vsyncpa %s1565, 1
    %1567 = vsyncpa [#allocation6], 1
    %s1568 = scalar_lea.sflag [#allocation6], 1
    %1569 = vsyncpa %s1568, 1

</llo_original>
